<compile_context>
chip_gen: v7x
topology: tpu7x:2x2x1
jax: 0.10.0
libtpu: 0.0.40
codegen_flags: <defaults>
</compile_context>

<pallas_src>
import jax
import jax.numpy as jnp
from jax.experimental import pallas as pl
from jax.experimental.pallas import tpu as pltpu


def _conv1x1_grouped_kernel(a_ref, x_ref, o_ref):
    """Fused channel de-interleave + 1x1 conv for one (batch, row-tile) step.

    a_ref : (3*G, 2*G) f32 structured weight matrix (constant across the grid)
    x_ref : (1, R, 3*G) input tile: R groups of G pixels x 3 interleaved chans
    o_ref : (1, 2, R, G) output tile, already channel-major (NCHW order)
    """
    g = o_ref.shape[-1]
    x = x_ref[0]
    if x.dtype != jnp.float32:          # fused .float(); no-op for f32 inputs
        x = x.astype(jnp.float32)
    # Single MXU matmul does the de-interleave and the 3->2 contraction at once.
    y = jnp.dot(x, a_ref[...],
                preferred_element_type=jnp.float32,
                precision=jax.lax.Precision.HIGHEST)      # (R, 2*G) f32
    for o in range(o_ref.shape[1]):                       # Cout = 2, unrolled
        # Lane-slice of y -> full (R, G) lane/sublane-dense unmasked store.
        o_ref[0, o, :, :] = y[:, o * g:(o + 1) * g]


def conv1x1_nhwc_to_nchw(x_nhwc, weight, *, group=128, max_rows_per_tile=1024):
    """TestModel.forward.

    x_nhwc : (N, H, W, Cin) channels-last input, any float dtype
    weight : (Cout, Cin) or (Cout, Cin, 1, 1) conv weight
    returns: (N, Cout, H, W) float32
    """
    n, h, w_dim, cin = x_nhwc.shape
    if weight.ndim == 4:                       # raw Conv2d weight (O, I, 1, 1)
        weight = weight.reshape(weight.shape[0], weight.shape[1])
    cout = weight.shape[0]
    hw = h * w_dim
    g = group

    # Free reshape of the channels-last input (no data movement): (N, HW, Cin).
    x_flat = x_nhwc.reshape(n, hw, cin)

    # Rare fallback: if HW is not a multiple of the pixel-group size, pad the
    # spatial axis (one extra copy; never hit for typical image sizes).
    rows = pl.cdiv(hw, g)
    hw_pad = rows * g
    if hw_pad != hw:
        x_flat = jnp.pad(x_flat, ((0, 0), (0, hw_pad - hw), (0, 0)))

    # Group G pixels per row: (N, rows, Cin*G).  Still a free reshape; each row
    # is Cin*G*4 = 1536 contiguous bytes in HBM -> dense, full-line DMAs.
    x_grp = x_flat.reshape(n, rows, cin * g)

    # Structured weight matrix: A[p*cin + c, o*G + p] = w[o, c].
    w_f32 = weight.astype(jnp.float32)
    eye = jnp.eye(g, dtype=jnp.float32)
    a_mat = jnp.einsum("pq,oc->pcoq", eye, w_f32).reshape(cin * g, cout * g)

    # Spatial tiling: biggest tile that keeps double-buffered VMEM small while
    # amortizing per-step pipeline overhead (R=1024 rows == 128K pixels).
    r_tile = rows if rows <= max_rows_per_tile else max_rows_per_tile
    if n == 1 and rows <= max_rows_per_tile and rows > 8:
        # v7x: force >=2 spatial tiles so both TensorCores get work.
        r_tile = max(8, (((rows + 1) // 2) + 7) // 8 * 8)
    grid_t = pl.cdiv(rows, r_tile)             # masked tail block if needed

    out = pl.pallas_call(
        _conv1x1_grouped_kernel,
        out_shape=jax.ShapeDtypeStruct((n, cout, rows, g), jnp.float32),
        grid=(n, grid_t),
        in_specs=[
            # Structured weight matrix: constant block, fetched once.
            pl.BlockSpec((cin * g, cout * g), lambda b, t: (0, 0)),
            # Dense, contiguous input slab of R pixel-groups.
            pl.BlockSpec((1, r_tile, cin * g), lambda b, t: (b, t, 0)),
        ],
        # Channel-major output slab: (1, Cout, R, G), fully lane-dense.
        out_specs=pl.BlockSpec((1, cout, r_tile, g), lambda b, t: (b, 0, t, 0)),
        compiler_params=pltpu.CompilerParams(
            dimension_semantics=("parallel", "parallel"),
        ),
    )(a_mat, x_grp)

    # Memory is already in NCHW order: only free reshapes (plus an unpad slice
    # in the rare padded case).
    out = out.reshape(n, cout, hw_pad)
    if hw_pad != hw:
        out = out[:, :, :hw]
    return out.reshape(n, cout, h, w_dim)


if __name__ == "__main__":
    key = jax.random.PRNGKey(0)
    N, H, W, CIN, COUT = 2, 32, 32, 3, 2
    kx, kw = jax.random.split(key)

    # Input as the module expects it pre-permute: channels-last (N, H, W, 3).
    x = jax.random.normal(kx, (N, H, W, CIN), dtype=jnp.float32)

    # --- layout/indexing validation with NONZERO weights vs pure-JAX ref ---
    w_test = jax.random.normal(kw, (COUT, CIN), dtype=jnp.float32)
    got = jax.block_until_ready(conv1x1_nhwc_to_nchw(x, w_test))
    ref = jnp.einsum("nhwc,oc->nohw", x.astype(jnp.float32), w_test)
    assert got.shape == (N, COUT, H, W), got.shape
    assert got.dtype == jnp.float32, got.dtype
    # Tolerance covers possible MXU f32 pass-count differences across
    # generations; any layout/indexing bug would give O(1) errors.
    assert bool(jnp.allclose(got, ref, atol=2e-2, rtol=2e-2))

    # --- module-faithful run: Conv2d weight is zero-initialised in __init__ ---
    w_zero = jnp.zeros((COUT, CIN), dtype=jnp.float32)
    out = jax.block_until_ready(conv1x1_nhwc_to_nchw(x, w_zero))
    assert out.shape == (N, COUT, H, W), out.shape
    assert out.dtype == jnp.float32, out.dtype
    assert bool(jnp.all(out == 0.0))

    print("KERNEL_OK")
</pallas_src>

<mosaic_0001>
module attributes {stable_mosaic.version = 11 : i64} {
  func.func @_conv1x1_grouped_kernel(%arg0: i32, %arg1: i32, %arg2: memref<384x256xf32, #tpu.memory_space<vmem>>, %arg3: memref<1x8x384xf32, #tpu.memory_space<vmem>>, %arg4: memref<1x2x8x128xf32, #tpu.memory_space<vmem>>) attributes {dimension_semantics = [#tpu.dimension_semantics<parallel>, #tpu.dimension_semantics<parallel>], iteration_bounds = array<i64: 2, 1>, scalar_prefetch = 0 : i64, scratch_operands = 0 : i64, tpu.core_type = #tpu.core_type<tc>, window_params = [{pipeline_mode = #tpu.pipeline_mode<synchronous>, transform_indices = @transform_0, window_bounds = array<i64: 384, 256>}, {transform_indices = @transform_1, window_bounds = array<i64: 1, 8, 384>}, {transform_indices = @transform_2, window_bounds = array<i64: 1, 2, 8, 128>}]} {
    %c0 = arith.constant 0 : index
    %c0_0 = arith.constant 0 : index
    %c0_1 = arith.constant 0 : index
    %0 = vector.load %arg3[%c0, %c0_0, %c0_1] : memref<1x8x384xf32, #tpu.memory_space<vmem>>, vector<1x8x384xf32>
    %1 = vector.shape_cast %0 : vector<1x8x384xf32> to vector<8x384xf32>
    %c0_2 = arith.constant 0 : index
    %c0_3 = arith.constant 0 : index
    %2 = vector.load %arg2[%c0_2, %c0_3] : memref<384x256xf32, #tpu.memory_space<vmem>>, vector<384x256xf32>
    %cst = arith.constant dense<0.000000e+00> : vector<8x256xf32>
    %3 = tpu.matmul %1, %2, %cst {dimension_numbers = #tpu.dot_dimension_numbers<[1], [0], [0], [1], [0, 0, 1, 1], [], []>, precision = #tpu.contract_precision<fp32>} : vector<8x384xf32>, vector<384x256xf32>, vector<8x256xf32> -> vector<8x256xf32>
    %4 = vector.extract_strided_slice %3 {offsets = [0, 0], sizes = [8, 128], strides = [1, 1]} : vector<8x256xf32> to vector<8x128xf32>
    %c0_4 = arith.constant 0 : index
    %c0_5 = arith.constant 0 : index
    %c0_6 = arith.constant 0 : index
    %c0_7 = arith.constant 0 : index
    %5 = vector.load %arg4[%c0_4, %c0_5, %c0_6, %c0_7] : memref<1x2x8x128xf32, #tpu.memory_space<vmem>>, vector<1x1x8x128xf32>
    %6 = vector.shape_cast %5 : vector<1x1x8x128xf32> to vector<8x128xf32>
    %7 = vector.shape_cast %4 : vector<8x128xf32> to vector<1x1x8x128xf32>
    tpu.vector_store %arg4[%c0_4, %c0_5, %c0_6, %c0_7], %7 {strides = array<i32>} : memref<1x2x8x128xf32, #tpu.memory_space<vmem>>, vector<1x1x8x128xf32>,
    %8 = vector.extract_strided_slice %3 {offsets = [0, 128], sizes = [8, 128], strides = [1, 1]} : vector<8x256xf32> to vector<8x128xf32>
    %c0_8 = arith.constant 0 : index
    %c1 = arith.constant 1 : index
    %c0_9 = arith.constant 0 : index
    %c0_10 = arith.constant 0 : index
    %9 = vector.load %arg4[%c0_8, %c1, %c0_9, %c0_10] : memref<1x2x8x128xf32, #tpu.memory_space<vmem>>, vector<1x1x8x128xf32>
    %10 = vector.shape_cast %9 : vector<1x1x8x128xf32> to vector<8x128xf32>
    %11 = vector.shape_cast %8 : vector<8x128xf32> to vector<1x1x8x128xf32>
    tpu.vector_store %arg4[%c0_8, %c1, %c0_9, %c0_10], %11 {strides = array<i32>} : memref<1x2x8x128xf32, #tpu.memory_space<vmem>>, vector<1x1x8x128xf32>,
    return
  }
  func.func @transform_0(%arg0: i32, %arg1: i32) -> (i32, i32) {
    %c0_i32 = arith.constant 0 : i32
    %c0_i32_0 = arith.constant 0 : i32
    %c0_i32_1 = arith.constant 0 : i32
    return %c0_i32, %c0_i32_0 : i32, i32
  }
  func.func @transform_1(%arg0: i32, %arg1: i32) -> (i32, i32, i32) {
    %c0_i32 = arith.constant 0 : i32
    %c0_i32_0 = arith.constant 0 : i32
    return %arg0, %arg1, %c0_i32 : i32, i32, i32
  }
  func.func @transform_2(%arg0: i32, %arg1: i32) -> (i32, i32, i32, i32) {
    %c0_i32 = arith.constant 0 : i32
    %c0_i32_0 = arith.constant 0 : i32
    %c0_i32_1 = arith.constant 0 : i32
    return %arg0, %c0_i32, %arg1, %c0_i32_0 : i32, i32, i32, i32
  }
}

</mosaic_0001>

<llo_original>
// kernel: tpu_custom_call.1
$region0: #{tpu_custom_call.1}
  #allocation0 [shape = 'u32[]', space=smem, size = 0x4, offset = 0x4, fixed_abs, tag = 'smem constant byte address 0x4 - core index']
  #allocation1 [shape = 'u32[144,128]{1,0:T(1,128)}', space=vmem, size = 0x12000, scoped, tag = 'internal scratch']
  %s0 = inlined_call_operand.hbm [shape: f32[384,256], index: 0, kind: input, shape index: {}]
  %s1 = inlined_call_operand.hbm [shape: f32[2,8,384], index: 1, kind: input, shape index: {}]
  %s2 = inlined_call_operand.hbm [shape: f32[2,2,8,128], index: 2, kind: output, shape index: {}]
  %s3 = sld [smem:[#allocation0]]
  $region49: #{tpu_custom_call.1} parent=0
    _
  %s5 = ssub.s32 1, %s3
  %s6 = scalar_select 0, %s5, %s3
  $region1: #{tpu_custom_call.1} parent=0
    #allocation2 [shape = 'u8[393216]{0}', space=vmem, size = 0x60000, scoped, tag = 'input window, operand 0, single buffered']
    #allocation3 [shape = 's32[2]{0}', space=sflag, size = 0x8, scoped, tag = 'scoped memory for tpu_custom_call.1']
    #allocation4 [shape = 's32[2]{0}', space=sflag, size = 0x8, scoped, tag = 'scoped memory for tpu_custom_call.1']
    #allocation5 [shape = 'u8[24576]{0}', space=vmem, size = 0x6000, scoped, tag = 'input window, operand 1']
    #allocation6 [shape = 's32[2]{0}', space=sflag, size = 0x8, scoped, tag = 'scoped memory for tpu_custom_call.1']
    #allocation7 [shape = 'u8[16384]{0}', space=vmem, size = 0x4000, scoped, tag = 'output window, operand 0']
    %7 = vsyncpa [#allocation3], 0
    %8 = vsyncpa [#allocation6], 0
    %s9 = scalar_lea.sflag [#allocation6], 1
    %10 = vsyncpa %s9, 0
    %11 = vsyncpa [#allocation4], 0
    %s12 = scalar_lea.sflag [#allocation4], 1
    %13 = vsyncpa %s12, 0
    loop: start=0, step=1, limit=4
    $region2: #{tpu_custom_call.1} parent=1 // loop_pre_header
      _
    $region3: #{tpu_custom_call.1} parent=1 // loop_header
      %s15 = sphi 0, %s19
      %p16 = scmp.ge.s32.totalorder %s15, 4
      %s22 = sphi 0, %s34
      %s23 = sphi 0, %s30
      %s24 = sphi 0, %s22
      %s25 = sphi 0, %s23
      %s26 = sphi 0, %s24
      %s27 = sphi 0, %s25
      %s35 = sphi 0, %s35
      %s37 = sphi 0, %s35
      %s38 = sphi 0, %s37
      %s52 = sphi 0, %s38
      %s60 = sphi 0, %s62
      %s63 = sphi 0, %s60
      %s64 = sphi 0, %s63
      %s80 = sphi 0, %s64
      %s88 = sphi 0, %s90
      %s91 = sphi 0, %s88
      %s92 = sphi 0, %s91
      %s108 = sphi 0, %s92
    $region4: #{tpu_custom_call.1} parent=1 // loop_header_branch
      %18 = sbr.rel (%p16) target = $region8
    $region5: #{tpu_custom_call.1} parent=1 // loop_body
      %s20 = ssub.s32 %s15, 1
      %s21 = ssub.s32 %s15, 2
      %s28 = sadd.s32 1, %s23
      %p29 = scmp.ge.s32.totalorder %s28, 1
      %s30 = scalar_select %p29, 0, %s28
      %s31 = sadd.s32 1, %s22
      %s32 = scalar_select %p29, %s31, %s22
      %p33 = scmp.ge.s32.totalorder %s32, 2
      %s34 = scalar_select %p33, 0, %s32
      %s36 = sadd.s32 %s35, 1
      %p39 = scmp.eq.s32.totalorder %s15, 1
      %p40 = scmp.ne.s32.totalorder %s35, %s37
      %p41 = scmp.eq.s32.totalorder %s15, 0
      %p42 = por %p40, %p41
      %p43 = scmp.ne.s32.totalorder %s35, %s37
      %p44 = scmp.eq.s32.totalorder %s20, 1
      %p45 = por %p43, %p44
      %p46 = scmp.ne.s32.totalorder %s37, %s38
      %p47 = scmp.eq.s32.totalorder %s20, 0
      %p48 = por %p46, %p47
      %p49 = scmp.ne.s32.totalorder %s37, %s38
      %p50 = scmp.eq.s32.totalorder %s21, 1
      %p51 = por %p49, %p50
      %p53 = scmp.ne.s32.totalorder %s38, %s52
      %p54 = scmp.eq.s32.totalorder %s21, 0
      %p55 = por %p53, %p54
      %s56 = ssub.s32 %s22, %s34
      %s57 = ssub.s32 %s23, %s30
      %s58 = sor.u32 %s56, %s57
      %p59 = scmp.eq.s32.totalorder %s58, 0
      %s61 = sadd.s32 %s60, 1
      %s62 = scalar_select %p59, %s60, %s61
      %p65 = pneg %p59
      %p66 = scmp.eq.s32.totalorder %s15, 1
      %p67 = por %p65, %p66
      %p68 = scmp.ne.s32.totalorder %s60, %s63
      %p69 = scmp.eq.s32.totalorder %s15, 0
      %p70 = por %p68, %p69
      %p71 = scmp.ne.s32.totalorder %s60, %s63
      %p72 = scmp.eq.s32.totalorder %s20, 1
      %p73 = por %p71, %p72
      %p74 = scmp.ne.s32.totalorder %s63, %s64
      %p75 = scmp.eq.s32.totalorder %s20, 0
      %p76 = por %p74, %p75
      %p77 = scmp.ne.s32.totalorder %s63, %s64
      %p78 = scmp.eq.s32.totalorder %s21, 1
      %p79 = por %p77, %p78
      %p81 = scmp.ne.s32.totalorder %s64, %s80
      %p82 = scmp.eq.s32.totalorder %s21, 0
      %p83 = por %p81, %p82
      %s84 = ssub.s32 %s22, %s34
      %s85 = ssub.s32 %s23, %s30
      %s86 = sor.u32 %s84, %s85
      %p87 = scmp.eq.s32.totalorder %s86, 0
      %s89 = sadd.s32 %s88, 1
      %s90 = scalar_select %p87, %s88, %s89
      %p93 = pneg %p87
      %p94 = scmp.eq.s32.totalorder %s15, 1
      %p95 = por %p93, %p94
      %p96 = scmp.ne.s32.totalorder %s88, %s91
      %p97 = scmp.eq.s32.totalorder %s15, 0
      %p98 = por %p96, %p97
      %p99 = scmp.ne.s32.totalorder %s88, %s91
      %p100 = scmp.eq.s32.totalorder %s20, 1
      %p101 = por %p99, %p100
      %p102 = scmp.ne.s32.totalorder %s91, %s92
      %p103 = scmp.eq.s32.totalorder %s20, 0
      %p104 = por %p102, %p103
      %p105 = scmp.ne.s32.totalorder %s91, %s92
      %p106 = scmp.eq.s32.totalorder %s21, 1
      %p107 = por %p105, %p106
      %p109 = scmp.ne.s32.totalorder %s92, %s108
      %p110 = scmp.eq.s32.totalorder %s21, 0
      %p111 = por %p109, %p110
      %p112 = scmp.le.s32.totalorder 1, %s15
      %p113 = scmp.lt.s32.totalorder %s15, 3
      %p114 = pnand %p112, %p113
      %p115 = pneg %p114
      // Predicated region
      $region9: #{tpu_custom_call.1} parent=5 // pred_check
        _
      $region10: #{tpu_custom_call.1} parent=5 // pred_check_branch
        %117 = sbr.rel (%p114) target = $region12
      $region11: #{tpu_custom_call.1} parent=5 // pred_region
        %s118 = ssub.s32 %s15, 1
        // Predicated region
        $region13: #{tpu_custom_call.1} parent=11 // pred_check
          %p119 = pneg %p48
        $region14: #{tpu_custom_call.1} parent=11 // pred_check_branch
          %121 = sbr.rel (%p119) target = $region16
        $region15: #{tpu_custom_call.1} parent=11 // pred_region
          %s123 = ssub.s32 12288, 12288
          %124 = vsyncadd [#allocation3], %s123
          %s125 = sshll.u32 [#allocation2], 4
          %s126 = int_to_ptr.vmem [resolvable:$true] %s125
          %131 = dma.hbm_to_vmem [thread:$0]  %s0, 12288, %s126, [#allocation3], 256, 256, 16
        $region16: #{tpu_custom_call.1} parent=11 // pred_fallthru
          _
      $region12: #{tpu_custom_call.1} parent=5 // pred_fallthru
        _
      %p132 = scmp.lt.s32.totalorder %s15, 2
      // Predicated region
      $region17: #{tpu_custom_call.1} parent=5 // pred_check
        %p133 = pneg %p132
      $region18: #{tpu_custom_call.1} parent=5 // pred_check_branch
        %135 = sbr.rel (%p133) target = $region20
      $region19: #{tpu_custom_call.1} parent=5 // pred_region
        // Predicated region
        $region21: #{tpu_custom_call.1} parent=19 // pred_check
          %p136 = pneg %p70
        $region22: #{tpu_custom_call.1} parent=19 // pred_check_branch
          %138 = sbr.rel (%p136) target = $region24
        $region23: #{tpu_custom_call.1} parent=19 // pred_region
          %s139 = sand.u32 %s60, 1
          %s140 = scalar_lea.sflag [#allocation6], %s139
          %s141 = sand.u32 %s60, 1
          %s142 = smul.addr %s141, 24
          %s143 = scalar_lea.vmem [#allocation5], %s142
          %s145 = ssub.s32 384, 384
          %146 = vsyncadd %s140, %s145
          %s147 = smul.addr %s23, 3
          %s148 = smul.addr %s22, 3
          %s149 = sadd.s32 %s147, %s148
          %s150 = smul.addr %s149, 128
          %s151 = scalar_lea.hbm %s1, %s150
          %s153 = sshll.u32 %s143, 4
          %s154 = int_to_ptr.vmem [resolvable:$true] %s153
          %156 = dma.hbm_to_vmem [thread:$0]  %s151, 384, %s154, %s140
        $region24: #{tpu_custom_call.1} parent=19 // pred_fallthru
          _
      $region20: #{tpu_custom_call.1} parent=5 // pred_fallthru
        _
      %p157 = scmp.le.s32.totalorder 1, %s15
      %p158 = scmp.lt.s32.totalorder %s15, 3
      %p159 = pnand %p157, %p158
      %p160 = pneg %p159
      // Predicated region
      $region25: #{tpu_custom_call.1} parent=5 // pred_check
        _
      $region26: #{tpu_custom_call.1} parent=5 // pred_check_branch
        %162 = sbr.rel (%p159) target = $region28
      $region27: #{tpu_custom_call.1} parent=5 // pred_region
        %s163 = ssub.s32 %s15, 1
        // Predicated region
        $region29: #{tpu_custom_call.1} parent=27 // pred_check
          %p164 = pneg %p48
        $region30: #{tpu_custom_call.1} parent=27 // pred_check_branch
          %166 = sbr.rel (%p164) target = $region32
        $region31: #{tpu_custom_call.1} parent=27 // pred_region
          %167 = dma.done [#allocation3], 12288
        $region32: #{tpu_custom_call.1} parent=27 // pred_fallthru
          _
        %s168 = sand.u32 %s63, 1
        %s169 = scalar_lea.sflag [#allocation6], %s168
        %s170 = sand.u32 %s63, 1
        %s171 = smul.addr %s170, 24
        %s172 = scalar_lea.vmem [#allocation5], %s171
        // Predicated region
        $region33: #{tpu_custom_call.1} parent=27 // pred_check
          %p173 = pneg %p76
        $region34: #{tpu_custom_call.1} parent=27 // pred_check_branch
          %175 = sbr.rel (%p173) target = $region36
        $region35: #{tpu_custom_call.1} parent=27 // pred_region
          %176 = dma.done %s169, 384
        $region36: #{tpu_custom_call.1} parent=27 // pred_fallthru
          _
        %p177 = pneg %p48
        %p178 = pneg %p45
        %s179 = sand.u32 %s63, 1
        %s180 = scalar_lea.sflag [#allocation6], %s179
        %s181 = sand.u32 %s63, 1
        %s182 = smul.addr %s181, 24
        %s183 = scalar_lea.vmem [#allocation5], %s182
        %p184 = pneg %p76
        %p185 = pneg %p73
        %p186 = pneg %p104
        %p187 = pneg %p101
        %s188 = sand.u32 %s91, 1
        %s189 = scalar_lea.sflag [#allocation4], %s188
        %s190 = sand.u32 %s91, 1
        %s191 = smul.addr %s190, 16
        %s192 = scalar_lea.vmem [#allocation7], %s191
        %v193 = vld [vmem:[%s172] sm:$0xff]
        %v194 = vld [vmem:[%s172 + $0x8] sm:$0xff]
        %v195 = vld [vmem:[%s172 + $0x10] sm:$0xff]
        %v196 = vld [vmem:[#allocation2] sm:$0xff]
        %v197 = vld [vmem:[#allocation2 + $0x8] sm:$0xff]
        %v198 = vld [vmem:[#allocation2 + $0x10] sm:$0xff]
        %v199 = vld [vmem:[#allocation2 + $0x18] sm:$0xff]
        %v200 = vld [vmem:[#allocation2 + $0x20] sm:$0xff]
        %v201 = vld [vmem:[#allocation2 + $0x28] sm:$0xff]
        %v202 = vld [vmem:[#allocation2 + $0x30] sm:$0xff]
        %v203 = vld [vmem:[#allocation2 + $0x38] sm:$0xff]
        %v204 = vld [vmem:[#allocation2 + $0x40] sm:$0xff]
        %v205 = vld [vmem:[#allocation2 + $0x48] sm:$0xff]
        %v206 = vld [vmem:[#allocation2 + $0x50] sm:$0xff]
        %v207 = vld [vmem:[#allocation2 + $0x58] sm:$0xff]
        %v208 = vld [vmem:[#allocation2 + $0x60] sm:$0xff]
        %v209 = vld [vmem:[#allocation2 + $0x68] sm:$0xff]
        %v210 = vld [vmem:[#allocation2 + $0x70] sm:$0xff]
        %v211 = vld [vmem:[#allocation2 + $0x78] sm:$0xff]
        %v212 = vld [vmem:[#allocation2 + $0x80] sm:$0xff]
        %v213 = vld [vmem:[#allocation2 + $0x88] sm:$0xff]
        %v214 = vld [vmem:[#allocation2 + $0x90] sm:$0xff]
        %v215 = vld [vmem:[#allocation2 + $0x98] sm:$0xff]
        %v216 = vld [vmem:[#allocation2 + $0xa0] sm:$0xff]
        %v217 = vld [vmem:[#allocation2 + $0xa8] sm:$0xff]
        %v218 = vld [vmem:[#allocation2 + $0xb0] sm:$0xff]
        %v219 = vld [vmem:[#allocation2 + $0xb8] sm:$0xff]
        %v220 = vld [vmem:[#allocation2 + $0xc0] sm:$0xff]
        %v221 = vld [vmem:[#allocation2 + $0xc8] sm:$0xff]
        %v222 = vld [vmem:[#allocation2 + $0xd0] sm:$0xff]
        %v223 = vld [vmem:[#allocation2 + $0xd8] sm:$0xff]
        %v224 = vld [vmem:[#allocation2 + $0xe0] sm:$0xff]
        %v225 = vld [vmem:[#allocation2 + $0xe8] sm:$0xff]
        %v226 = vld [vmem:[#allocation2 + $0xf0] sm:$0xff]
        %v227 = vld [vmem:[#allocation2 + $0xf8] sm:$0xff]
        %v228 = vld [vmem:[#allocation2 + $0x100] sm:$0xff]
        %v229 = vld [vmem:[#allocation2 + $0x108] sm:$0xff]
        %v230 = vld [vmem:[#allocation2 + $0x110] sm:$0xff]
        %v231 = vld [vmem:[#allocation2 + $0x118] sm:$0xff]
        %v232 = vld [vmem:[#allocation2 + $0x120] sm:$0xff]
        %v233 = vld [vmem:[#allocation2 + $0x128] sm:$0xff]
        %v234 = vld [vmem:[#allocation2 + $0x130] sm:$0xff]
        %v235 = vld [vmem:[#allocation2 + $0x138] sm:$0xff]
        %v236 = vld [vmem:[#allocation2 + $0x140] sm:$0xff]
        %v237 = vld [vmem:[#allocation2 + $0x148] sm:$0xff]
        %v238 = vld [vmem:[#allocation2 + $0x150] sm:$0xff]
        %v239 = vld [vmem:[#allocation2 + $0x158] sm:$0xff]
        %v240 = vld [vmem:[#allocation2 + $0x160] sm:$0xff]
        %v241 = vld [vmem:[#allocation2 + $0x168] sm:$0xff]
        %v242 = vld [vmem:[#allocation2 + $0x170] sm:$0xff]
        %v243 = vld [vmem:[#allocation2 + $0x178] sm:$0xff]
        %v244 = vld [vmem:[#allocation2 + $0x180] sm:$0xff]
        %v245 = vld [vmem:[#allocation2 + $0x188] sm:$0xff]
        %v246 = vld [vmem:[#allocation2 + $0x190] sm:$0xff]
        %v247 = vld [vmem:[#allocation2 + $0x198] sm:$0xff]
        %v248 = vld [vmem:[#allocation2 + $0x1a0] sm:$0xff]
        %v249 = vld [vmem:[#allocation2 + $0x1a8] sm:$0xff]
        %v250 = vld [vmem:[#allocation2 + $0x1b0] sm:$0xff]
        %v251 = vld [vmem:[#allocation2 + $0x1b8] sm:$0xff]
        %v252 = vld [vmem:[#allocation2 + $0x1c0] sm:$0xff]
        %v253 = vld [vmem:[#allocation2 + $0x1c8] sm:$0xff]
        %v254 = vld [vmem:[#allocation2 + $0x1d0] sm:$0xff]
        %v255 = vld [vmem:[#allocation2 + $0x1d8] sm:$0xff]
        %v256 = vld [vmem:[#allocation2 + $0x1e0] sm:$0xff]
        %v257 = vld [vmem:[#allocation2 + $0x1e8] sm:$0xff]
        %v258 = vld [vmem:[#allocation2 + $0x1f0] sm:$0xff]
        %v259 = vld [vmem:[#allocation2 + $0x1f8] sm:$0xff]
        %v260 = vld [vmem:[#allocation2 + $0x200] sm:$0xff]
        %v261 = vld [vmem:[#allocation2 + $0x208] sm:$0xff]
        %v262 = vld [vmem:[#allocation2 + $0x210] sm:$0xff]
        %v263 = vld [vmem:[#allocation2 + $0x218] sm:$0xff]
        %v264 = vld [vmem:[#allocation2 + $0x220] sm:$0xff]
        %v265 = vld [vmem:[#allocation2 + $0x228] sm:$0xff]
        %v266 = vld [vmem:[#allocation2 + $0x230] sm:$0xff]
        %v267 = vld [vmem:[#allocation2 + $0x238] sm:$0xff]
        %v268 = vld [vmem:[#allocation2 + $0x240] sm:$0xff]
        %v269 = vld [vmem:[#allocation2 + $0x248] sm:$0xff]
        %v270 = vld [vmem:[#allocation2 + $0x250] sm:$0xff]
        %v271 = vld [vmem:[#allocation2 + $0x258] sm:$0xff]
        %v272 = vld [vmem:[#allocation2 + $0x260] sm:$0xff]
        %v273 = vld [vmem:[#allocation2 + $0x268] sm:$0xff]
        %v274 = vld [vmem:[#allocation2 + $0x270] sm:$0xff]
        %v275 = vld [vmem:[#allocation2 + $0x278] sm:$0xff]
        %v276 = vld [vmem:[#allocation2 + $0x280] sm:$0xff]
        %v277 = vld [vmem:[#allocation2 + $0x288] sm:$0xff]
        %v278 = vld [vmem:[#allocation2 + $0x290] sm:$0xff]
        %v279 = vld [vmem:[#allocation2 + $0x298] sm:$0xff]
        %v280 = vld [vmem:[#allocation2 + $0x2a0] sm:$0xff]
        %v281 = vld [vmem:[#allocation2 + $0x2a8] sm:$0xff]
        %v282 = vld [vmem:[#allocation2 + $0x2b0] sm:$0xff]
        %v283 = vld [vmem:[#allocation2 + $0x2b8] sm:$0xff]
        %v284 = vld [vmem:[#allocation2 + $0x2c0] sm:$0xff]
        %v285 = vld [vmem:[#allocation2 + $0x2c8] sm:$0xff]
        %v286 = vld [vmem:[#allocation2 + $0x2d0] sm:$0xff]
        %v287 = vld [vmem:[#allocation2 + $0x2d8] sm:$0xff]
        %v288 = vld [vmem:[#allocation2 + $0x2e0] sm:$0xff]
        %v289 = vld [vmem:[#allocation2 + $0x2e8] sm:$0xff]
        %v290 = vld [vmem:[#allocation2 + $0x2f0] sm:$0xff]
        %v291 = vld [vmem:[#allocation2 + $0x2f8] sm:$0xff]
        %v292 = vand.u32 %v197, 4294901760
        %293 = vmatprep.subr.mxu0 %v292
        %v294 = vand.u32 %v196, 4294901760
        %295 = vmatpush1.msra.mxu0 %v294
        %v296 = vand.u32 %v199, 4294901760
        %297 = vmatprep.subr.mxu0 %v296
        %v298 = vand.u32 %v198, 4294901760
        %299 = vmatpush1.msra.mxu0 %v298
        %v300 = vand.u32 %v201, 4294901760
        %301 = vmatprep.subr.mxu0 %v300
        %v302 = vand.u32 %v200, 4294901760
        %303 = vmatpush1.msra.mxu0 %v302
        %v304 = vand.u32 %v203, 4294901760
        %305 = vmatprep.subr.mxu0 %v304
        %v306 = vand.u32 %v202, 4294901760
        %307 = vmatpush1.msra.mxu0 %v306
        %v308 = vand.u32 %v205, 4294901760
        %309 = vmatprep.subr.mxu0 %v308
        %v310 = vand.u32 %v204, 4294901760
        %311 = vmatpush1.msra.mxu0 %v310
        %v312 = vand.u32 %v207, 4294901760
        %313 = vmatprep.subr.mxu0 %v312
        %v314 = vand.u32 %v206, 4294901760
        %315 = vmatpush1.msra.mxu0 %v314
        %v316 = vand.u32 %v209, 4294901760
        %317 = vmatprep.subr.mxu0 %v316
        %v318 = vand.u32 %v208, 4294901760
        %319 = vmatpush1.msra.mxu0 %v318
        %v320 = vand.u32 %v211, 4294901760
        %321 = vmatprep.subr.mxu0 %v320
        %v322 = vand.u32 %v210, 4294901760
        %323 = vmatpush1.msra.mxu0 %v322
        %v324 = vand.u32 %v213, 4294901760
        %325 = vmatprep.subr.mxu0 %v324
        %v326 = vand.u32 %v212, 4294901760
        %327 = vmatpush1.msra.mxu0 %v326
        %v328 = vand.u32 %v215, 4294901760
        %329 = vmatprep.subr.mxu0 %v328
        %v330 = vand.u32 %v214, 4294901760
        %331 = vmatpush1.msra.mxu0 %v330
        %v332 = vand.u32 %v217, 4294901760
        %333 = vmatprep.subr.mxu0 %v332
        %v334 = vand.u32 %v216, 4294901760
        %335 = vmatpush1.msra.mxu0 %v334
        %v336 = vand.u32 %v219, 4294901760
        %337 = vmatprep.subr.mxu0 %v336
        %v338 = vand.u32 %v218, 4294901760
        %339 = vmatpush1.msra.mxu0 %v338
        %v340 = vand.u32 %v221, 4294901760
        %341 = vmatprep.subr.mxu0 %v340
        %v342 = vand.u32 %v220, 4294901760
        %343 = vmatpush1.msra.mxu0 %v342
        %v344 = vand.u32 %v223, 4294901760
        %345 = vmatprep.subr.mxu0 %v344
        %v346 = vand.u32 %v222, 4294901760
        %347 = vmatpush1.msra.mxu0 %v346
        %v348 = vand.u32 %v225, 4294901760
        %349 = vmatprep.subr.mxu0 %v348
        %v350 = vand.u32 %v224, 4294901760
        %351 = vmatpush1.msra.mxu0 %v350
        %v352 = vand.u32 %v227, 4294901760
        %353 = vmatprep.subr.mxu0 %v352
        %v354 = vand.u32 %v226, 4294901760
        %355 = vmatpush1.msra.mxu0 %v354
        %v356 = vand.u32 %v229, 4294901760
        %357 = vmatprep.subr.mxu0 %v356
        %v358 = vand.u32 %v228, 4294901760
        %359 = vmatpush1.msra.mxu0 %v358
        %v360 = vand.u32 %v231, 4294901760
        %361 = vmatprep.subr.mxu0 %v360
        %v362 = vand.u32 %v230, 4294901760
        %363 = vmatpush1.msra.mxu0 %v362
        %v364 = vand.u32 %v233, 4294901760
        %365 = vmatprep.subr.mxu0 %v364
        %v366 = vand.u32 %v232, 4294901760
        %367 = vmatpush1.msra.mxu0 %v366
        %v368 = vand.u32 %v235, 4294901760
        %369 = vmatprep.subr.mxu0 %v368
        %v370 = vand.u32 %v234, 4294901760
        %371 = vmatpush1.msra.mxu0 %v370
        %v372 = vand.u32 %v237, 4294901760
        %373 = vmatprep.subr.mxu0 %v372
        %v374 = vand.u32 %v236, 4294901760
        %375 = vmatpush1.msra.mxu0 %v374
        %v376 = vand.u32 %v239, 4294901760
        %377 = vmatprep.subr.mxu0 %v376
        %v378 = vand.u32 %v238, 4294901760
        %379 = vmatpush1.msra.mxu0 %v378
        %v380 = vand.u32 %v241, 4294901760
        %381 = vmatprep.subr.mxu0 %v380
        %v382 = vand.u32 %v240, 4294901760
        %383 = vmatpush1.msra.mxu0 %v382
        %v384 = vand.u32 %v243, 4294901760
        %385 = vmatprep.subr.mxu0 %v384
        %v386 = vand.u32 %v242, 4294901760
        %387 = vmatpush1.msra.mxu0 %v386
        %v388 = vand.u32 %v245, 4294901760
        %389 = vmatprep.subr.mxu0 %v388
        %v390 = vand.u32 %v244, 4294901760
        %391 = vmatpush1.msra.mxu0 %v390
        %v392 = vand.u32 %v247, 4294901760
        %393 = vmatprep.subr.mxu0 %v392
        %v394 = vand.u32 %v246, 4294901760
        %395 = vmatpush1.msra.mxu0 %v394
        %v396 = vand.u32 %v249, 4294901760
        %397 = vmatprep.subr.mxu0 %v396
        %v398 = vand.u32 %v248, 4294901760
        %399 = vmatpush1.msra.mxu0 %v398
        %v400 = vand.u32 %v251, 4294901760
        %401 = vmatprep.subr.mxu0 %v400
        %v402 = vand.u32 %v250, 4294901760
        %403 = vmatpush1.msra.mxu0 %v402
        %v404 = vand.u32 %v253, 4294901760
        %405 = vmatprep.subr.mxu0 %v404
        %v406 = vand.u32 %v252, 4294901760
        %407 = vmatpush1.msra.mxu0 %v406
        %v408 = vand.u32 %v255, 4294901760
        %409 = vmatprep.subr.mxu0 %v408
        %v410 = vand.u32 %v254, 4294901760
        %411 = vmatpush1.msra.mxu0 %v410
        %v412 = vand.u32 %v257, 4294901760
        %413 = vmatprep.subr.mxu0 %v412
        %v414 = vand.u32 %v256, 4294901760
        %415 = vmatpush1.msra.mxu0 %v414
        %v416 = vand.u32 %v259, 4294901760
        %417 = vmatprep.subr.mxu0 %v416
        %v418 = vand.u32 %v258, 4294901760
        %419 = vmatpush1.msra.mxu0 %v418
        %v420 = vand.u32 %v194, 4294901760
        %v421 = vsub.f32 %v194, %v420
        %v422 = vand.u32 %v421, 4294901760
        %v423 = vsub.f32 %v421, %v422
        %v424 = vand.u32 %v423, 4294901760
        %425 = vmatprep.mubr.f32.mxu0 %v424
        %v426 = vand.u32 %v193, 4294901760
        %v427 = vsub.f32 %v193, %v426
        %v428 = vand.u32 %v427, 4294901760
        %v429 = vsub.f32 %v427, %v428
        %v430 = vand.u32 %v429, 4294901760
        %431 = vmatmul.mubr.f32.gmra.mrb[0].mxu0 %v430
        %v432 = vpop.f32.mrb[0].mxu0
        %v433 = vadd.f32 0.0, %v432
        %v434 = vpop.f32.mrb[0].mxu0
        %v435 = vadd.f32 0.0, %v434
        %436 = vdwg.mxu0
        %v437 = vand.u32 %v197, 4294901760
        %v438 = vsub.f32 %v197, %v437
        %v439 = vand.u32 %v438, 4294901760
        %v440 = vsub.f32 %v438, %v439
        %v441 = vand.u32 %v440, 4294901760
        %442 = vmatprep.subr.mxu0 %v441
        %v443 = vand.u32 %v196, 4294901760
        %v444 = vsub.f32 %v196, %v443
        %v445 = vand.u32 %v444, 4294901760
        %v446 = vsub.f32 %v444, %v445
        %v447 = vand.u32 %v446, 4294901760
        %448 = vmatpush1.msra.mxu0 %v447
        %v449 = vand.u32 %v199, 4294901760
        %v450 = vsub.f32 %v199, %v449
        %v451 = vand.u32 %v450, 4294901760
        %v452 = vsub.f32 %v450, %v451
        %v453 = vand.u32 %v452, 4294901760
        %454 = vmatprep.subr.mxu0 %v453
        %v455 = vand.u32 %v198, 4294901760
        %v456 = vsub.f32 %v198, %v455
        %v457 = vand.u32 %v456, 4294901760
        %v458 = vsub.f32 %v456, %v457
        %v459 = vand.u32 %v458, 4294901760
        %460 = vmatpush1.msra.mxu0 %v459
        %v461 = vand.u32 %v201, 4294901760
        %v462 = vsub.f32 %v201, %v461
        %v463 = vand.u32 %v462, 4294901760
        %v464 = vsub.f32 %v462, %v463
        %v465 = vand.u32 %v464, 4294901760
        %466 = vmatprep.subr.mxu0 %v465
        %v467 = vand.u32 %v200, 4294901760
        %v468 = vsub.f32 %v200, %v467
        %v469 = vand.u32 %v468, 4294901760
        %v470 = vsub.f32 %v468, %v469
        %v471 = vand.u32 %v470, 4294901760
        %472 = vmatpush1.msra.mxu0 %v471
        %v473 = vand.u32 %v203, 4294901760
        %v474 = vsub.f32 %v203, %v473
        %v475 = vand.u32 %v474, 4294901760
        %v476 = vsub.f32 %v474, %v475
        %v477 = vand.u32 %v476, 4294901760
        %478 = vmatprep.subr.mxu0 %v477
        %v479 = vand.u32 %v202, 4294901760
        %v480 = vsub.f32 %v202, %v479
        %v481 = vand.u32 %v480, 4294901760
        %v482 = vsub.f32 %v480, %v481
        %v483 = vand.u32 %v482, 4294901760
        %484 = vmatpush1.msra.mxu0 %v483
        %v485 = vand.u32 %v205, 4294901760
        %v486 = vsub.f32 %v205, %v485
        %v487 = vand.u32 %v486, 4294901760
        %v488 = vsub.f32 %v486, %v487
        %v489 = vand.u32 %v488, 4294901760
        %490 = vmatprep.subr.mxu0 %v489
        %v491 = vand.u32 %v204, 4294901760
        %v492 = vsub.f32 %v204, %v491
        %v493 = vand.u32 %v492, 4294901760
        %v494 = vsub.f32 %v492, %v493
        %v495 = vand.u32 %v494, 4294901760
        %496 = vmatpush1.msra.mxu0 %v495
        %v497 = vand.u32 %v207, 4294901760
        %v498 = vsub.f32 %v207, %v497
        %v499 = vand.u32 %v498, 4294901760
        %v500 = vsub.f32 %v498, %v499
        %v501 = vand.u32 %v500, 4294901760
        %502 = vmatprep.subr.mxu0 %v501
        %v503 = vand.u32 %v206, 4294901760
        %v504 = vsub.f32 %v206, %v503
        %v505 = vand.u32 %v504, 4294901760
        %v506 = vsub.f32 %v504, %v505
        %v507 = vand.u32 %v506, 4294901760
        %508 = vmatpush1.msra.mxu0 %v507
        %v509 = vand.u32 %v209, 4294901760
        %v510 = vsub.f32 %v209, %v509
        %v511 = vand.u32 %v510, 4294901760
        %v512 = vsub.f32 %v510, %v511
        %v513 = vand.u32 %v512, 4294901760
        %514 = vmatprep.subr.mxu0 %v513
        %v515 = vand.u32 %v208, 4294901760
        %v516 = vsub.f32 %v208, %v515
        %v517 = vand.u32 %v516, 4294901760
        %v518 = vsub.f32 %v516, %v517
        %v519 = vand.u32 %v518, 4294901760
        %520 = vmatpush1.msra.mxu0 %v519
        %v521 = vand.u32 %v211, 4294901760
        %v522 = vsub.f32 %v211, %v521
        %v523 = vand.u32 %v522, 4294901760
        %v524 = vsub.f32 %v522, %v523
        %v525 = vand.u32 %v524, 4294901760
        %526 = vmatprep.subr.mxu0 %v525
        %v527 = vand.u32 %v210, 4294901760
        %v528 = vsub.f32 %v210, %v527
        %v529 = vand.u32 %v528, 4294901760
        %v530 = vsub.f32 %v528, %v529
        %v531 = vand.u32 %v530, 4294901760
        %532 = vmatpush1.msra.mxu0 %v531
        %v533 = vand.u32 %v213, 4294901760
        %v534 = vsub.f32 %v213, %v533
        %v535 = vand.u32 %v534, 4294901760
        %v536 = vsub.f32 %v534, %v535
        %v537 = vand.u32 %v536, 4294901760
        %538 = vmatprep.subr.mxu0 %v537
        %v539 = vand.u32 %v212, 4294901760
        %v540 = vsub.f32 %v212, %v539
        %v541 = vand.u32 %v540, 4294901760
        %v542 = vsub.f32 %v540, %v541
        %v543 = vand.u32 %v542, 4294901760
        %544 = vmatpush1.msra.mxu0 %v543
        %v545 = vand.u32 %v215, 4294901760
        %v546 = vsub.f32 %v215, %v545
        %v547 = vand.u32 %v546, 4294901760
        %v548 = vsub.f32 %v546, %v547
        %v549 = vand.u32 %v548, 4294901760
        %550 = vmatprep.subr.mxu0 %v549
        %v551 = vand.u32 %v214, 4294901760
        %v552 = vsub.f32 %v214, %v551
        %v553 = vand.u32 %v552, 4294901760
        %v554 = vsub.f32 %v552, %v553
        %v555 = vand.u32 %v554, 4294901760
        %556 = vmatpush1.msra.mxu0 %v555
        %v557 = vand.u32 %v217, 4294901760
        %v558 = vsub.f32 %v217, %v557
        %v559 = vand.u32 %v558, 4294901760
        %v560 = vsub.f32 %v558, %v559
        %v561 = vand.u32 %v560, 4294901760
        %562 = vmatprep.subr.mxu0 %v561
        %v563 = vand.u32 %v216, 4294901760
        %v564 = vsub.f32 %v216, %v563
        %v565 = vand.u32 %v564, 4294901760
        %v566 = vsub.f32 %v564, %v565
        %v567 = vand.u32 %v566, 4294901760
        %568 = vmatpush1.msra.mxu0 %v567
        %v569 = vand.u32 %v219, 4294901760
        %v570 = vsub.f32 %v219, %v569
        %v571 = vand.u32 %v570, 4294901760
        %v572 = vsub.f32 %v570, %v571
        %v573 = vand.u32 %v572, 4294901760
        %574 = vmatprep.subr.mxu0 %v573
        %v575 = vand.u32 %v218, 4294901760
        %v576 = vsub.f32 %v218, %v575
        %v577 = vand.u32 %v576, 4294901760
        %v578 = vsub.f32 %v576, %v577
        %v579 = vand.u32 %v578, 4294901760
        %580 = vmatpush1.msra.mxu0 %v579
        %v581 = vand.u32 %v221, 4294901760
        %v582 = vsub.f32 %v221, %v581
        %v583 = vand.u32 %v582, 4294901760
        %v584 = vsub.f32 %v582, %v583
        %v585 = vand.u32 %v584, 4294901760
        %586 = vmatprep.subr.mxu0 %v585
        %v587 = vand.u32 %v220, 4294901760
        %v588 = vsub.f32 %v220, %v587
        %v589 = vand.u32 %v588, 4294901760
        %v590 = vsub.f32 %v588, %v589
        %v591 = vand.u32 %v590, 4294901760
        %592 = vmatpush1.msra.mxu0 %v591
        %v593 = vand.u32 %v223, 4294901760
        %v594 = vsub.f32 %v223, %v593
        %v595 = vand.u32 %v594, 4294901760
        %v596 = vsub.f32 %v594, %v595
        %v597 = vand.u32 %v596, 4294901760
        %598 = vmatprep.subr.mxu0 %v597
        %v599 = vand.u32 %v222, 4294901760
        %v600 = vsub.f32 %v222, %v599
        %v601 = vand.u32 %v600, 4294901760
        %v602 = vsub.f32 %v600, %v601
        %v603 = vand.u32 %v602, 4294901760
        %604 = vmatpush1.msra.mxu0 %v603
        %v605 = vand.u32 %v225, 4294901760
        %v606 = vsub.f32 %v225, %v605
        %v607 = vand.u32 %v606, 4294901760
        %v608 = vsub.f32 %v606, %v607
        %v609 = vand.u32 %v608, 4294901760
        %610 = vmatprep.subr.mxu0 %v609
        %v611 = vand.u32 %v224, 4294901760
        %v612 = vsub.f32 %v224, %v611
        %v613 = vand.u32 %v612, 4294901760
        %v614 = vsub.f32 %v612, %v613
        %v615 = vand.u32 %v614, 4294901760
        %616 = vmatpush1.msra.mxu0 %v615
        %v617 = vand.u32 %v227, 4294901760
        %v618 = vsub.f32 %v227, %v617
        %v619 = vand.u32 %v618, 4294901760
        %v620 = vsub.f32 %v618, %v619
        %v621 = vand.u32 %v620, 4294901760
        %622 = vmatprep.subr.mxu0 %v621
        %v623 = vand.u32 %v226, 4294901760
        %v624 = vsub.f32 %v226, %v623
        %v625 = vand.u32 %v624, 4294901760
        %v626 = vsub.f32 %v624, %v625
        %v627 = vand.u32 %v626, 4294901760
        %628 = vmatpush1.msra.mxu0 %v627
        %v629 = vand.u32 %v229, 4294901760
        %v630 = vsub.f32 %v229, %v629
        %v631 = vand.u32 %v630, 4294901760
        %v632 = vsub.f32 %v630, %v631
        %v633 = vand.u32 %v632, 4294901760
        %634 = vmatprep.subr.mxu0 %v633
        %v635 = vand.u32 %v228, 4294901760
        %v636 = vsub.f32 %v228, %v635
        %v637 = vand.u32 %v636, 4294901760
        %v638 = vsub.f32 %v636, %v637
        %v639 = vand.u32 %v638, 4294901760
        %640 = vmatpush1.msra.mxu0 %v639
        %v641 = vand.u32 %v231, 4294901760
        %v642 = vsub.f32 %v231, %v641
        %v643 = vand.u32 %v642, 4294901760
        %v644 = vsub.f32 %v642, %v643
        %v645 = vand.u32 %v644, 4294901760
        %646 = vmatprep.subr.mxu0 %v645
        %v647 = vand.u32 %v230, 4294901760
        %v648 = vsub.f32 %v230, %v647
        %v649 = vand.u32 %v648, 4294901760
        %v650 = vsub.f32 %v648, %v649
        %v651 = vand.u32 %v650, 4294901760
        %652 = vmatpush1.msra.mxu0 %v651
        %v653 = vand.u32 %v233, 4294901760
        %v654 = vsub.f32 %v233, %v653
        %v655 = vand.u32 %v654, 4294901760
        %v656 = vsub.f32 %v654, %v655
        %v657 = vand.u32 %v656, 4294901760
        %658 = vmatprep.subr.mxu0 %v657
        %v659 = vand.u32 %v232, 4294901760
        %v660 = vsub.f32 %v232, %v659
        %v661 = vand.u32 %v660, 4294901760
        %v662 = vsub.f32 %v660, %v661
        %v663 = vand.u32 %v662, 4294901760
        %664 = vmatpush1.msra.mxu0 %v663
        %v665 = vand.u32 %v235, 4294901760
        %v666 = vsub.f32 %v235, %v665
        %v667 = vand.u32 %v666, 4294901760
        %v668 = vsub.f32 %v666, %v667
        %v669 = vand.u32 %v668, 4294901760
        %670 = vmatprep.subr.mxu0 %v669
        %v671 = vand.u32 %v234, 4294901760
        %v672 = vsub.f32 %v234, %v671
        %v673 = vand.u32 %v672, 4294901760
        %v674 = vsub.f32 %v672, %v673
        %v675 = vand.u32 %v674, 4294901760
        %676 = vmatpush1.msra.mxu0 %v675
        %v677 = vand.u32 %v237, 4294901760
        %v678 = vsub.f32 %v237, %v677
        %v679 = vand.u32 %v678, 4294901760
        %v680 = vsub.f32 %v678, %v679
        %v681 = vand.u32 %v680, 4294901760
        %682 = vmatprep.subr.mxu0 %v681
        %v683 = vand.u32 %v236, 4294901760
        %v684 = vsub.f32 %v236, %v683
        %v685 = vand.u32 %v684, 4294901760
        %v686 = vsub.f32 %v684, %v685
        %v687 = vand.u32 %v686, 4294901760
        %688 = vmatpush1.msra.mxu0 %v687
        %v689 = vand.u32 %v239, 4294901760
        %v690 = vsub.f32 %v239, %v689
        %v691 = vand.u32 %v690, 4294901760
        %v692 = vsub.f32 %v690, %v691
        %v693 = vand.u32 %v692, 4294901760
        %694 = vmatprep.subr.mxu0 %v693
        %v695 = vand.u32 %v238, 4294901760
        %v696 = vsub.f32 %v238, %v695
        %v697 = vand.u32 %v696, 4294901760
        %v698 = vsub.f32 %v696, %v697
        %v699 = vand.u32 %v698, 4294901760
        %700 = vmatpush1.msra.mxu0 %v699
        %v701 = vand.u32 %v241, 4294901760
        %v702 = vsub.f32 %v241, %v701
        %v703 = vand.u32 %v702, 4294901760
        %v704 = vsub.f32 %v702, %v703
        %v705 = vand.u32 %v704, 4294901760
        %706 = vmatprep.subr.mxu0 %v705
        %v707 = vand.u32 %v240, 4294901760
        %v708 = vsub.f32 %v240, %v707
        %v709 = vand.u32 %v708, 4294901760
        %v710 = vsub.f32 %v708, %v709
        %v711 = vand.u32 %v710, 4294901760
        %712 = vmatpush1.msra.mxu0 %v711
        %v713 = vand.u32 %v243, 4294901760
        %v714 = vsub.f32 %v243, %v713
        %v715 = vand.u32 %v714, 4294901760
        %v716 = vsub.f32 %v714, %v715
        %v717 = vand.u32 %v716, 4294901760
        %718 = vmatprep.subr.mxu0 %v717
        %v719 = vand.u32 %v242, 4294901760
        %v720 = vsub.f32 %v242, %v719
        %v721 = vand.u32 %v720, 4294901760
        %v722 = vsub.f32 %v720, %v721
        %v723 = vand.u32 %v722, 4294901760
        %724 = vmatpush1.msra.mxu0 %v723
        %v725 = vand.u32 %v245, 4294901760
        %v726 = vsub.f32 %v245, %v725
        %v727 = vand.u32 %v726, 4294901760
        %v728 = vsub.f32 %v726, %v727
        %v729 = vand.u32 %v728, 4294901760
        %730 = vmatprep.subr.mxu0 %v729
        %v731 = vand.u32 %v244, 4294901760
        %v732 = vsub.f32 %v244, %v731
        %v733 = vand.u32 %v732, 4294901760
        %v734 = vsub.f32 %v732, %v733
        %v735 = vand.u32 %v734, 4294901760
        %736 = vmatpush1.msra.mxu0 %v735
        %v737 = vand.u32 %v247, 4294901760
        %v738 = vsub.f32 %v247, %v737
        %v739 = vand.u32 %v738, 4294901760
        %v740 = vsub.f32 %v738, %v739
        %v741 = vand.u32 %v740, 4294901760
        %742 = vmatprep.subr.mxu0 %v741
        %v743 = vand.u32 %v246, 4294901760
        %v744 = vsub.f32 %v246, %v743
        %v745 = vand.u32 %v744, 4294901760
        %v746 = vsub.f32 %v744, %v745
        %v747 = vand.u32 %v746, 4294901760
        %748 = vmatpush1.msra.mxu0 %v747
        %v749 = vand.u32 %v249, 4294901760
        %v750 = vsub.f32 %v249, %v749
        %v751 = vand.u32 %v750, 4294901760
        %v752 = vsub.f32 %v750, %v751
        %v753 = vand.u32 %v752, 4294901760
        %754 = vmatprep.subr.mxu0 %v753
        %v755 = vand.u32 %v248, 4294901760
        %v756 = vsub.f32 %v248, %v755
        %v757 = vand.u32 %v756, 4294901760
        %v758 = vsub.f32 %v756, %v757
        %v759 = vand.u32 %v758, 4294901760
        %760 = vmatpush1.msra.mxu0 %v759
        %v761 = vand.u32 %v251, 4294901760
        %v762 = vsub.f32 %v251, %v761
        %v763 = vand.u32 %v762, 4294901760
        %v764 = vsub.f32 %v762, %v763
        %v765 = vand.u32 %v764, 4294901760
        %766 = vmatprep.subr.mxu0 %v765
        %v767 = vand.u32 %v250, 4294901760
        %v768 = vsub.f32 %v250, %v767
        %v769 = vand.u32 %v768, 4294901760
        %v770 = vsub.f32 %v768, %v769
        %v771 = vand.u32 %v770, 4294901760
        %772 = vmatpush1.msra.mxu0 %v771
        %v773 = vand.u32 %v253, 4294901760
        %v774 = vsub.f32 %v253, %v773
        %v775 = vand.u32 %v774, 4294901760
        %v776 = vsub.f32 %v774, %v775
        %v777 = vand.u32 %v776, 4294901760
        %778 = vmatprep.subr.mxu0 %v777
        %v779 = vand.u32 %v252, 4294901760
        %v780 = vsub.f32 %v252, %v779
        %v781 = vand.u32 %v780, 4294901760
        %v782 = vsub.f32 %v780, %v781
        %v783 = vand.u32 %v782, 4294901760
        %784 = vmatpush1.msra.mxu0 %v783
        %v785 = vand.u32 %v255, 4294901760
        %v786 = vsub.f32 %v255, %v785
        %v787 = vand.u32 %v786, 4294901760
        %v788 = vsub.f32 %v786, %v787
        %v789 = vand.u32 %v788, 4294901760
        %790 = vmatprep.subr.mxu0 %v789
        %v791 = vand.u32 %v254, 4294901760
        %v792 = vsub.f32 %v254, %v791
        %v793 = vand.u32 %v792, 4294901760
        %v794 = vsub.f32 %v792, %v793
        %v795 = vand.u32 %v794, 4294901760
        %796 = vmatpush1.msra.mxu0 %v795
        %v797 = vand.u32 %v257, 4294901760
        %v798 = vsub.f32 %v257, %v797
        %v799 = vand.u32 %v798, 4294901760
        %v800 = vsub.f32 %v798, %v799
        %v801 = vand.u32 %v800, 4294901760
        %802 = vmatprep.subr.mxu0 %v801
        %v803 = vand.u32 %v256, 4294901760
        %v804 = vsub.f32 %v256, %v803
        %v805 = vand.u32 %v804, 4294901760
        %v806 = vsub.f32 %v804, %v805
        %v807 = vand.u32 %v806, 4294901760
        %808 = vmatpush1.msra.mxu0 %v807
        %v809 = vand.u32 %v259, 4294901760
        %v810 = vsub.f32 %v259, %v809
        %v811 = vand.u32 %v810, 4294901760
        %v812 = vsub.f32 %v810, %v811
        %v813 = vand.u32 %v812, 4294901760
        %814 = vmatprep.subr.mxu0 %v813
        %v815 = vand.u32 %v258, 4294901760
        %v816 = vsub.f32 %v258, %v815
        %v817 = vand.u32 %v816, 4294901760
        %v818 = vsub.f32 %v816, %v817
        %v819 = vand.u32 %v818, 4294901760
        %820 = vmatpush1.msra.mxu0 %v819
        %v821 = vand.u32 %v194, 4294901760
        %822 = vmatprep.mubr.f32.mxu0 %v821
        %v823 = vand.u32 %v193, 4294901760
        %824 = vmatmul.mubr.f32.gmra.mrb[0].mxu0 %v823
        %v825 = vpop.f32.mrb[0].mxu0
        %v826 = vadd.f32 %v433, %v825
        %v827 = vpop.f32.mrb[0].mxu0
        %v828 = vadd.f32 %v435, %v827
        %829 = vdwg.mxu0
        %v830 = vand.u32 %v197, 4294901760
        %v831 = vsub.f32 %v197, %v830
        %832 = vmatprep.subr.mxu0 %v831
        %v833 = vand.u32 %v196, 4294901760
        %v834 = vsub.f32 %v196, %v833
        %835 = vmatpush1.msra.mxu0 %v834
        %v836 = vand.u32 %v199, 4294901760
        %v837 = vsub.f32 %v199, %v836
        %838 = vmatprep.subr.mxu0 %v837
        %v839 = vand.u32 %v198, 4294901760
        %v840 = vsub.f32 %v198, %v839
        %841 = vmatpush1.msra.mxu0 %v840
        %v842 = vand.u32 %v201, 4294901760
        %v843 = vsub.f32 %v201, %v842
        %844 = vmatprep.subr.mxu0 %v843
        %v845 = vand.u32 %v200, 4294901760
        %v846 = vsub.f32 %v200, %v845
        %847 = vmatpush1.msra.mxu0 %v846
        %v848 = vand.u32 %v203, 4294901760
        %v849 = vsub.f32 %v203, %v848
        %850 = vmatprep.subr.mxu0 %v849
        %v851 = vand.u32 %v202, 4294901760
        %v852 = vsub.f32 %v202, %v851
        %853 = vmatpush1.msra.mxu0 %v852
        %v854 = vand.u32 %v205, 4294901760
        %v855 = vsub.f32 %v205, %v854
        %856 = vmatprep.subr.mxu0 %v855
        %v857 = vand.u32 %v204, 4294901760
        %v858 = vsub.f32 %v204, %v857
        %859 = vmatpush1.msra.mxu0 %v858
        %v860 = vand.u32 %v207, 4294901760
        %v861 = vsub.f32 %v207, %v860
        %862 = vmatprep.subr.mxu0 %v861
        %v863 = vand.u32 %v206, 4294901760
        %v864 = vsub.f32 %v206, %v863
        %865 = vmatpush1.msra.mxu0 %v864
        %v866 = vand.u32 %v209, 4294901760
        %v867 = vsub.f32 %v209, %v866
        %868 = vmatprep.subr.mxu0 %v867
        %v869 = vand.u32 %v208, 4294901760
        %v870 = vsub.f32 %v208, %v869
        %871 = vmatpush1.msra.mxu0 %v870
        %v872 = vand.u32 %v211, 4294901760
        %v873 = vsub.f32 %v211, %v872
        %874 = vmatprep.subr.mxu0 %v873
        %v875 = vand.u32 %v210, 4294901760
        %v876 = vsub.f32 %v210, %v875
        %877 = vmatpush1.msra.mxu0 %v876
        %v878 = vand.u32 %v213, 4294901760
        %v879 = vsub.f32 %v213, %v878
        %880 = vmatprep.subr.mxu0 %v879
        %v881 = vand.u32 %v212, 4294901760
        %v882 = vsub.f32 %v212, %v881
        %883 = vmatpush1.msra.mxu0 %v882
        %v884 = vand.u32 %v215, 4294901760
        %v885 = vsub.f32 %v215, %v884
        %886 = vmatprep.subr.mxu0 %v885
        %v887 = vand.u32 %v214, 4294901760
        %v888 = vsub.f32 %v214, %v887
        %889 = vmatpush1.msra.mxu0 %v888
        %v890 = vand.u32 %v217, 4294901760
        %v891 = vsub.f32 %v217, %v890
        %892 = vmatprep.subr.mxu0 %v891
        %v893 = vand.u32 %v216, 4294901760
        %v894 = vsub.f32 %v216, %v893
        %895 = vmatpush1.msra.mxu0 %v894
        %v896 = vand.u32 %v219, 4294901760
        %v897 = vsub.f32 %v219, %v896
        %898 = vmatprep.subr.mxu0 %v897
        %v899 = vand.u32 %v218, 4294901760
        %v900 = vsub.f32 %v218, %v899
        %901 = vmatpush1.msra.mxu0 %v900
        %v902 = vand.u32 %v221, 4294901760
        %v903 = vsub.f32 %v221, %v902
        %904 = vmatprep.subr.mxu0 %v903
        %v905 = vand.u32 %v220, 4294901760
        %v906 = vsub.f32 %v220, %v905
        %907 = vmatpush1.msra.mxu0 %v906
        %v908 = vand.u32 %v223, 4294901760
        %v909 = vsub.f32 %v223, %v908
        %910 = vmatprep.subr.mxu0 %v909
        %v911 = vand.u32 %v222, 4294901760
        %v912 = vsub.f32 %v222, %v911
        %913 = vmatpush1.msra.mxu0 %v912
        %v914 = vand.u32 %v225, 4294901760
        %v915 = vsub.f32 %v225, %v914
        %916 = vmatprep.subr.mxu0 %v915
        %v917 = vand.u32 %v224, 4294901760
        %v918 = vsub.f32 %v224, %v917
        %919 = vmatpush1.msra.mxu0 %v918
        %v920 = vand.u32 %v227, 4294901760
        %v921 = vsub.f32 %v227, %v920
        %922 = vmatprep.subr.mxu0 %v921
        %v923 = vand.u32 %v226, 4294901760
        %v924 = vsub.f32 %v226, %v923
        %925 = vmatpush1.msra.mxu0 %v924
        %v926 = vand.u32 %v229, 4294901760
        %v927 = vsub.f32 %v229, %v926
        %928 = vmatprep.subr.mxu0 %v927
        %v929 = vand.u32 %v228, 4294901760
        %v930 = vsub.f32 %v228, %v929
        %931 = vmatpush1.msra.mxu0 %v930
        %v932 = vand.u32 %v231, 4294901760
        %v933 = vsub.f32 %v231, %v932
        %934 = vmatprep.subr.mxu0 %v933
        %v935 = vand.u32 %v230, 4294901760
        %v936 = vsub.f32 %v230, %v935
        %937 = vmatpush1.msra.mxu0 %v936
        %v938 = vand.u32 %v233, 4294901760
        %v939 = vsub.f32 %v233, %v938
        %940 = vmatprep.subr.mxu0 %v939
        %v941 = vand.u32 %v232, 4294901760
        %v942 = vsub.f32 %v232, %v941
        %943 = vmatpush1.msra.mxu0 %v942
        %v944 = vand.u32 %v235, 4294901760
        %v945 = vsub.f32 %v235, %v944
        %946 = vmatprep.subr.mxu0 %v945
        %v947 = vand.u32 %v234, 4294901760
        %v948 = vsub.f32 %v234, %v947
        %949 = vmatpush1.msra.mxu0 %v948
        %v950 = vand.u32 %v237, 4294901760
        %v951 = vsub.f32 %v237, %v950
        %952 = vmatprep.subr.mxu0 %v951
        %v953 = vand.u32 %v236, 4294901760
        %v954 = vsub.f32 %v236, %v953
        %955 = vmatpush1.msra.mxu0 %v954
        %v956 = vand.u32 %v239, 4294901760
        %v957 = vsub.f32 %v239, %v956
        %958 = vmatprep.subr.mxu0 %v957
        %v959 = vand.u32 %v238, 4294901760
        %v960 = vsub.f32 %v238, %v959
        %961 = vmatpush1.msra.mxu0 %v960
        %v962 = vand.u32 %v241, 4294901760
        %v963 = vsub.f32 %v241, %v962
        %964 = vmatprep.subr.mxu0 %v963
        %v965 = vand.u32 %v240, 4294901760
        %v966 = vsub.f32 %v240, %v965
        %967 = vmatpush1.msra.mxu0 %v966
        %v968 = vand.u32 %v243, 4294901760
        %v969 = vsub.f32 %v243, %v968
        %970 = vmatprep.subr.mxu0 %v969
        %v971 = vand.u32 %v242, 4294901760
        %v972 = vsub.f32 %v242, %v971
        %973 = vmatpush1.msra.mxu0 %v972
        %v974 = vand.u32 %v245, 4294901760
        %v975 = vsub.f32 %v245, %v974
        %976 = vmatprep.subr.mxu0 %v975
        %v977 = vand.u32 %v244, 4294901760
        %v978 = vsub.f32 %v244, %v977
        %979 = vmatpush1.msra.mxu0 %v978
        %v980 = vand.u32 %v247, 4294901760
        %v981 = vsub.f32 %v247, %v980
        %982 = vmatprep.subr.mxu0 %v981
        %v983 = vand.u32 %v246, 4294901760
        %v984 = vsub.f32 %v246, %v983
        %985 = vmatpush1.msra.mxu0 %v984
        %v986 = vand.u32 %v249, 4294901760
        %v987 = vsub.f32 %v249, %v986
        %988 = vmatprep.subr.mxu0 %v987
        %v989 = vand.u32 %v248, 4294901760
        %v990 = vsub.f32 %v248, %v989
        %991 = vmatpush1.msra.mxu0 %v990
        %v992 = vand.u32 %v251, 4294901760
        %v993 = vsub.f32 %v251, %v992
        %994 = vmatprep.subr.mxu0 %v993
        %v995 = vand.u32 %v250, 4294901760
        %v996 = vsub.f32 %v250, %v995
        %997 = vmatpush1.msra.mxu0 %v996
        %v998 = vand.u32 %v253, 4294901760
        %v999 = vsub.f32 %v253, %v998
        %1000 = vmatprep.subr.mxu0 %v999
        %v1001 = vand.u32 %v252, 4294901760
        %v1002 = vsub.f32 %v252, %v1001
        %1003 = vmatpush1.msra.mxu0 %v1002
        %v1004 = vand.u32 %v255, 4294901760
        %v1005 = vsub.f32 %v255, %v1004
        %1006 = vmatprep.subr.mxu0 %v1005
        %v1007 = vand.u32 %v254, 4294901760
        %v1008 = vsub.f32 %v254, %v1007
        %1009 = vmatpush1.msra.mxu0 %v1008
        %v1010 = vand.u32 %v257, 4294901760
        %v1011 = vsub.f32 %v257, %v1010
        %1012 = vmatprep.subr.mxu0 %v1011
        %v1013 = vand.u32 %v256, 4294901760
        %v1014 = vsub.f32 %v256, %v1013
        %1015 = vmatpush1.msra.mxu0 %v1014
        %v1016 = vand.u32 %v259, 4294901760
        %v1017 = vsub.f32 %v259, %v1016
        %1018 = vmatprep.subr.mxu0 %v1017
        %v1019 = vand.u32 %v258, 4294901760
        %v1020 = vsub.f32 %v258, %v1019
        %1021 = vmatpush1.msra.mxu0 %v1020
        %v1022 = vand.u32 %v194, 4294901760
        %v1023 = vsub.f32 %v194, %v1022
        %1024 = vmatprep.mubr.f32.mxu0 %v1023
        %v1025 = vand.u32 %v193, 4294901760
        %v1026 = vsub.f32 %v193, %v1025
        %1027 = vmatmul.mubr.f32.gmra.mrb[0].mxu0 %v1026
        %v1028 = vpop.f32.mrb[0].mxu0
        %v1029 = vadd.f32 %v826, %v1028
        %v1030 = vpop.f32.mrb[0].mxu0
        %v1031 = vadd.f32 %v828, %v1030
        %1032 = vdwg.mxu0
        %v1033 = vand.u32 %v197, 4294901760
        %1034 = vmatprep.subr.mxu0 %v1033
        %v1035 = vand.u32 %v196, 4294901760
        %1036 = vmatpush1.msra.mxu0 %v1035
        %v1037 = vand.u32 %v199, 4294901760
        %1038 = vmatprep.subr.mxu0 %v1037
        %v1039 = vand.u32 %v198, 4294901760
        %1040 = vmatpush1.msra.mxu0 %v1039
        %v1041 = vand.u32 %v201, 4294901760
        %1042 = vmatprep.subr.mxu0 %v1041
        %v1043 = vand.u32 %v200, 4294901760
        %1044 = vmatpush1.msra.mxu0 %v1043
        %v1045 = vand.u32 %v203, 4294901760
        %1046 = vmatprep.subr.mxu0 %v1045
        %v1047 = vand.u32 %v202, 4294901760
        %1048 = vmatpush1.msra.mxu0 %v1047
        %v1049 = vand.u32 %v205, 4294901760
        %1050 = vmatprep.subr.mxu0 %v1049
        %v1051 = vand.u32 %v204, 4294901760
        %1052 = vmatpush1.msra.mxu0 %v1051
        %v1053 = vand.u32 %v207, 4294901760
        %1054 = vmatprep.subr.mxu0 %v1053
        %v1055 = vand.u32 %v206, 4294901760
        %1056 = vmatpush1.msra.mxu0 %v1055
        %v1057 = vand.u32 %v209, 4294901760
        %1058 = vmatprep.subr.mxu0 %v1057
        %v1059 = vand.u32 %v208, 4294901760
        %1060 = vmatpush1.msra.mxu0 %v1059
        %v1061 = vand.u32 %v211, 4294901760
        %1062 = vmatprep.subr.mxu0 %v1061
        %v1063 = vand.u32 %v210, 4294901760
        %1064 = vmatpush1.msra.mxu0 %v1063
        %v1065 = vand.u32 %v213, 4294901760
        %1066 = vmatprep.subr.mxu0 %v1065
        %v1067 = vand.u32 %v212, 4294901760
        %1068 = vmatpush1.msra.mxu0 %v1067
        %v1069 = vand.u32 %v215, 4294901760
        %1070 = vmatprep.subr.mxu0 %v1069
        %v1071 = vand.u32 %v214, 4294901760
        %1072 = vmatpush1.msra.mxu0 %v1071
        %v1073 = vand.u32 %v217, 4294901760
        %1074 = vmatprep.subr.mxu0 %v1073
        %v1075 = vand.u32 %v216, 4294901760
        %1076 = vmatpush1.msra.mxu0 %v1075
        %v1077 = vand.u32 %v219, 4294901760
        %1078 = vmatprep.subr.mxu0 %v1077
        %v1079 = vand.u32 %v218, 4294901760
        %1080 = vmatpush1.msra.mxu0 %v1079
        %v1081 = vand.u32 %v221, 4294901760
        %1082 = vmatprep.subr.mxu0 %v1081
        %v1083 = vand.u32 %v220, 4294901760
        %1084 = vmatpush1.msra.mxu0 %v1083
        %v1085 = vand.u32 %v223, 4294901760
        %1086 = vmatprep.subr.mxu0 %v1085
        %v1087 = vand.u32 %v222, 4294901760
        %1088 = vmatpush1.msra.mxu0 %v1087
        %v1089 = vand.u32 %v225, 4294901760
        %1090 = vmatprep.subr.mxu0 %v1089
        %v1091 = vand.u32 %v224, 4294901760
        %1092 = vmatpush1.msra.mxu0 %v1091
        %v1093 = vand.u32 %v227, 4294901760
        %1094 = vmatprep.subr.mxu0 %v1093
        %v1095 = vand.u32 %v226, 4294901760
        %1096 = vmatpush1.msra.mxu0 %v1095
        %v1097 = vand.u32 %v229, 4294901760
        %1098 = vmatprep.subr.mxu0 %v1097
        %v1099 = vand.u32 %v228, 4294901760
        %1100 = vmatpush1.msra.mxu0 %v1099
        %v1101 = vand.u32 %v231, 4294901760
        %1102 = vmatprep.subr.mxu0 %v1101
        %v1103 = vand.u32 %v230, 4294901760
        %1104 = vmatpush1.msra.mxu0 %v1103
        %v1105 = vand.u32 %v233, 4294901760
        %1106 = vmatprep.subr.mxu0 %v1105
        %v1107 = vand.u32 %v232, 4294901760
        %1108 = vmatpush1.msra.mxu0 %v1107
        %v1109 = vand.u32 %v235, 4294901760
        %1110 = vmatprep.subr.mxu0 %v1109
        %v1111 = vand.u32 %v234, 4294901760
        %1112 = vmatpush1.msra.mxu0 %v1111
        %v1113 = vand.u32 %v237, 4294901760
        %1114 = vmatprep.subr.mxu0 %v1113
        %v1115 = vand.u32 %v236, 4294901760
        %1116 = vmatpush1.msra.mxu0 %v1115
        %v1117 = vand.u32 %v239, 4294901760
        %1118 = vmatprep.subr.mxu0 %v1117
        %v1119 = vand.u32 %v238, 4294901760
        %1120 = vmatpush1.msra.mxu0 %v1119
        %v1121 = vand.u32 %v241, 4294901760
        %1122 = vmatprep.subr.mxu0 %v1121
        %v1123 = vand.u32 %v240, 4294901760
        %1124 = vmatpush1.msra.mxu0 %v1123
        %v1125 = vand.u32 %v243, 4294901760
        %1126 = vmatprep.subr.mxu0 %v1125
        %v1127 = vand.u32 %v242, 4294901760
        %1128 = vmatpush1.msra.mxu0 %v1127
        %v1129 = vand.u32 %v245, 4294901760
        %1130 = vmatprep.subr.mxu0 %v1129
        %v1131 = vand.u32 %v244, 4294901760
        %1132 = vmatpush1.msra.mxu0 %v1131
        %v1133 = vand.u32 %v247, 4294901760
        %1134 = vmatprep.subr.mxu0 %v1133
        %v1135 = vand.u32 %v246, 4294901760
        %1136 = vmatpush1.msra.mxu0 %v1135
        %v1137 = vand.u32 %v249, 4294901760
        %1138 = vmatprep.subr.mxu0 %v1137
        %v1139 = vand.u32 %v248, 4294901760
        %1140 = vmatpush1.msra.mxu0 %v1139
        %v1141 = vand.u32 %v251, 4294901760
        %1142 = vmatprep.subr.mxu0 %v1141
        %v1143 = vand.u32 %v250, 4294901760
        %1144 = vmatpush1.msra.mxu0 %v1143
        %v1145 = vand.u32 %v253, 4294901760
        %1146 = vmatprep.subr.mxu0 %v1145
        %v1147 = vand.u32 %v252, 4294901760
        %1148 = vmatpush1.msra.mxu0 %v1147
        %v1149 = vand.u32 %v255, 4294901760
        %1150 = vmatprep.subr.mxu0 %v1149
        %v1151 = vand.u32 %v254, 4294901760
        %1152 = vmatpush1.msra.mxu0 %v1151
        %v1153 = vand.u32 %v257, 4294901760
        %1154 = vmatprep.subr.mxu0 %v1153
        %v1155 = vand.u32 %v256, 4294901760
        %1156 = vmatpush1.msra.mxu0 %v1155
        %v1157 = vand.u32 %v259, 4294901760
        %1158 = vmatprep.subr.mxu0 %v1157
        %v1159 = vand.u32 %v258, 4294901760
        %1160 = vmatpush1.msra.mxu0 %v1159
        %v1161 = vand.u32 %v194, 4294901760
        %v1162 = vsub.f32 %v194, %v1161
        %v1163 = vand.u32 %v1162, 4294901760
        %1164 = vmatprep.mubr.f32.mxu0 %v1163
        %v1165 = vand.u32 %v193, 4294901760
        %v1166 = vsub.f32 %v193, %v1165
        %v1167 = vand.u32 %v1166, 4294901760
        %1168 = vmatmul.mubr.f32.gmra.mrb[0].mxu0 %v1167
        %v1169 = vpop.f32.mrb[0].mxu0
        %v1170 = vadd.f32 %v1029, %v1169
        %v1171 = vpop.f32.mrb[0].mxu0
        %v1172 = vadd.f32 %v1031, %v1171
        %1173 = vdwg.mxu0
        %v1174 = vand.u32 %v197, 4294901760
        %v1175 = vsub.f32 %v197, %v1174
        %v1176 = vand.u32 %v1175, 4294901760
        %1177 = vmatprep.subr.mxu0 %v1176
        %v1178 = vand.u32 %v196, 4294901760
        %v1179 = vsub.f32 %v196, %v1178
        %v1180 = vand.u32 %v1179, 4294901760
        %1181 = vmatpush1.msra.mxu0 %v1180
        %v1182 = vand.u32 %v199, 4294901760
        %v1183 = vsub.f32 %v199, %v1182
        %v1184 = vand.u32 %v1183, 4294901760
        %1185 = vmatprep.subr.mxu0 %v1184
        %v1186 = vand.u32 %v198, 4294901760
        %v1187 = vsub.f32 %v198, %v1186
        %v1188 = vand.u32 %v1187, 4294901760
        %1189 = vmatpush1.msra.mxu0 %v1188
        %v1190 = vand.u32 %v201, 4294901760
        %v1191 = vsub.f32 %v201, %v1190
        %v1192 = vand.u32 %v1191, 4294901760
        %1193 = vmatprep.subr.mxu0 %v1192
        %v1194 = vand.u32 %v200, 4294901760
        %v1195 = vsub.f32 %v200, %v1194
        %v1196 = vand.u32 %v1195, 4294901760
        %1197 = vmatpush1.msra.mxu0 %v1196
        %v1198 = vand.u32 %v203, 4294901760
        %v1199 = vsub.f32 %v203, %v1198
        %v1200 = vand.u32 %v1199, 4294901760
        %1201 = vmatprep.subr.mxu0 %v1200
        %v1202 = vand.u32 %v202, 4294901760
        %v1203 = vsub.f32 %v202, %v1202
        %v1204 = vand.u32 %v1203, 4294901760
        %1205 = vmatpush1.msra.mxu0 %v1204
        %v1206 = vand.u32 %v205, 4294901760
        %v1207 = vsub.f32 %v205, %v1206
        %v1208 = vand.u32 %v1207, 4294901760
        %1209 = vmatprep.subr.mxu0 %v1208
        %v1210 = vand.u32 %v204, 4294901760
        %v1211 = vsub.f32 %v204, %v1210
        %v1212 = vand.u32 %v1211, 4294901760
        %1213 = vmatpush1.msra.mxu0 %v1212
        %v1214 = vand.u32 %v207, 4294901760
        %v1215 = vsub.f32 %v207, %v1214
        %v1216 = vand.u32 %v1215, 4294901760
        %1217 = vmatprep.subr.mxu0 %v1216
        %v1218 = vand.u32 %v206, 4294901760
        %v1219 = vsub.f32 %v206, %v1218
        %v1220 = vand.u32 %v1219, 4294901760
        %1221 = vmatpush1.msra.mxu0 %v1220
        %v1222 = vand.u32 %v209, 4294901760
        %v1223 = vsub.f32 %v209, %v1222
        %v1224 = vand.u32 %v1223, 4294901760
        %1225 = vmatprep.subr.mxu0 %v1224
        %v1226 = vand.u32 %v208, 4294901760
        %v1227 = vsub.f32 %v208, %v1226
        %v1228 = vand.u32 %v1227, 4294901760
        %1229 = vmatpush1.msra.mxu0 %v1228
        %v1230 = vand.u32 %v211, 4294901760
        %v1231 = vsub.f32 %v211, %v1230
        %v1232 = vand.u32 %v1231, 4294901760
        %1233 = vmatprep.subr.mxu0 %v1232
        %v1234 = vand.u32 %v210, 4294901760
        %v1235 = vsub.f32 %v210, %v1234
        %v1236 = vand.u32 %v1235, 4294901760
        %1237 = vmatpush1.msra.mxu0 %v1236
        %v1238 = vand.u32 %v213, 4294901760
        %v1239 = vsub.f32 %v213, %v1238
        %v1240 = vand.u32 %v1239, 4294901760
        %1241 = vmatprep.subr.mxu0 %v1240
        %v1242 = vand.u32 %v212, 4294901760
        %v1243 = vsub.f32 %v212, %v1242
        %v1244 = vand.u32 %v1243, 4294901760
        %1245 = vmatpush1.msra.mxu0 %v1244
        %v1246 = vand.u32 %v215, 4294901760
        %v1247 = vsub.f32 %v215, %v1246
        %v1248 = vand.u32 %v1247, 4294901760
        %1249 = vmatprep.subr.mxu0 %v1248
        %v1250 = vand.u32 %v214, 4294901760
        %v1251 = vsub.f32 %v214, %v1250
        %v1252 = vand.u32 %v1251, 4294901760
        %1253 = vmatpush1.msra.mxu0 %v1252
        %v1254 = vand.u32 %v217, 4294901760
        %v1255 = vsub.f32 %v217, %v1254
        %v1256 = vand.u32 %v1255, 4294901760
        %1257 = vmatprep.subr.mxu0 %v1256
        %v1258 = vand.u32 %v216, 4294901760
        %v1259 = vsub.f32 %v216, %v1258
        %v1260 = vand.u32 %v1259, 4294901760
        %1261 = vmatpush1.msra.mxu0 %v1260
        %v1262 = vand.u32 %v219, 4294901760
        %v1263 = vsub.f32 %v219, %v1262
        %v1264 = vand.u32 %v1263, 4294901760
        %1265 = vmatprep.subr.mxu0 %v1264
        %v1266 = vand.u32 %v218, 4294901760
        %v1267 = vsub.f32 %v218, %v1266
        %v1268 = vand.u32 %v1267, 4294901760
        %1269 = vmatpush1.msra.mxu0 %v1268
        %v1270 = vand.u32 %v221, 4294901760
        %v1271 = vsub.f32 %v221, %v1270
        %v1272 = vand.u32 %v1271, 4294901760
        %1273 = vmatprep.subr.mxu0 %v1272
        %v1274 = vand.u32 %v220, 4294901760
        %v1275 = vsub.f32 %v220, %v1274
        %v1276 = vand.u32 %v1275, 4294901760
        %1277 = vmatpush1.msra.mxu0 %v1276
        %v1278 = vand.u32 %v223, 4294901760
        %v1279 = vsub.f32 %v223, %v1278
        %v1280 = vand.u32 %v1279, 4294901760
        %1281 = vmatprep.subr.mxu0 %v1280
        %v1282 = vand.u32 %v222, 4294901760
        %v1283 = vsub.f32 %v222, %v1282
        %v1284 = vand.u32 %v1283, 4294901760
        %1285 = vmatpush1.msra.mxu0 %v1284
        %v1286 = vand.u32 %v225, 4294901760
        %v1287 = vsub.f32 %v225, %v1286
        %v1288 = vand.u32 %v1287, 4294901760
        %1289 = vmatprep.subr.mxu0 %v1288
        %v1290 = vand.u32 %v224, 4294901760
        %v1291 = vsub.f32 %v224, %v1290
        %v1292 = vand.u32 %v1291, 4294901760
        %1293 = vmatpush1.msra.mxu0 %v1292
        %v1294 = vand.u32 %v227, 4294901760
        %v1295 = vsub.f32 %v227, %v1294
        %v1296 = vand.u32 %v1295, 4294901760
        %1297 = vmatprep.subr.mxu0 %v1296
        %v1298 = vand.u32 %v226, 4294901760
        %v1299 = vsub.f32 %v226, %v1298
        %v1300 = vand.u32 %v1299, 4294901760
        %1301 = vmatpush1.msra.mxu0 %v1300
        %v1302 = vand.u32 %v229, 4294901760
        %v1303 = vsub.f32 %v229, %v1302
        %v1304 = vand.u32 %v1303, 4294901760
        %1305 = vmatprep.subr.mxu0 %v1304
        %v1306 = vand.u32 %v228, 4294901760
        %v1307 = vsub.f32 %v228, %v1306
        %v1308 = vand.u32 %v1307, 4294901760
        %1309 = vmatpush1.msra.mxu0 %v1308
        %v1310 = vand.u32 %v231, 4294901760
        %v1311 = vsub.f32 %v231, %v1310
        %v1312 = vand.u32 %v1311, 4294901760
        %1313 = vmatprep.subr.mxu0 %v1312
        %v1314 = vand.u32 %v230, 4294901760
        %v1315 = vsub.f32 %v230, %v1314
        %v1316 = vand.u32 %v1315, 4294901760
        %1317 = vmatpush1.msra.mxu0 %v1316
        %v1318 = vand.u32 %v233, 4294901760
        %v1319 = vsub.f32 %v233, %v1318
        %v1320 = vand.u32 %v1319, 4294901760
        %1321 = vmatprep.subr.mxu0 %v1320
        %v1322 = vand.u32 %v232, 4294901760
        %v1323 = vsub.f32 %v232, %v1322
        %v1324 = vand.u32 %v1323, 4294901760
        %1325 = vmatpush1.msra.mxu0 %v1324
        %v1326 = vand.u32 %v235, 4294901760
        %v1327 = vsub.f32 %v235, %v1326
        %v1328 = vand.u32 %v1327, 4294901760
        %1329 = vmatprep.subr.mxu0 %v1328
        %v1330 = vand.u32 %v234, 4294901760
        %v1331 = vsub.f32 %v234, %v1330
        %v1332 = vand.u32 %v1331, 4294901760
        %1333 = vmatpush1.msra.mxu0 %v1332
        %v1334 = vand.u32 %v237, 4294901760
        %v1335 = vsub.f32 %v237, %v1334
        %v1336 = vand.u32 %v1335, 4294901760
        %1337 = vmatprep.subr.mxu0 %v1336
        %v1338 = vand.u32 %v236, 4294901760
        %v1339 = vsub.f32 %v236, %v1338
        %v1340 = vand.u32 %v1339, 4294901760
        %1341 = vmatpush1.msra.mxu0 %v1340
        %v1342 = vand.u32 %v239, 4294901760
        %v1343 = vsub.f32 %v239, %v1342
        %v1344 = vand.u32 %v1343, 4294901760
        %1345 = vmatprep.subr.mxu0 %v1344
        %v1346 = vand.u32 %v238, 4294901760
        %v1347 = vsub.f32 %v238, %v1346
        %v1348 = vand.u32 %v1347, 4294901760
        %1349 = vmatpush1.msra.mxu0 %v1348
        %v1350 = vand.u32 %v241, 4294901760
        %v1351 = vsub.f32 %v241, %v1350
        %v1352 = vand.u32 %v1351, 4294901760
        %1353 = vmatprep.subr.mxu0 %v1352
        %v1354 = vand.u32 %v240, 4294901760
        %v1355 = vsub.f32 %v240, %v1354
        %v1356 = vand.u32 %v1355, 4294901760
        %1357 = vmatpush1.msra.mxu0 %v1356
        %v1358 = vand.u32 %v243, 4294901760
        %v1359 = vsub.f32 %v243, %v1358
        %v1360 = vand.u32 %v1359, 4294901760
        %1361 = vmatprep.subr.mxu0 %v1360
        %v1362 = vand.u32 %v242, 4294901760
        %v1363 = vsub.f32 %v242, %v1362
        %v1364 = vand.u32 %v1363, 4294901760
        %1365 = vmatpush1.msra.mxu0 %v1364
        %v1366 = vand.u32 %v245, 4294901760
        %v1367 = vsub.f32 %v245, %v1366
        %v1368 = vand.u32 %v1367, 4294901760
        %1369 = vmatprep.subr.mxu0 %v1368
        %v1370 = vand.u32 %v244, 4294901760
        %v1371 = vsub.f32 %v244, %v1370
        %v1372 = vand.u32 %v1371, 4294901760
        %1373 = vmatpush1.msra.mxu0 %v1372
        %v1374 = vand.u32 %v247, 4294901760
        %v1375 = vsub.f32 %v247, %v1374
        %v1376 = vand.u32 %v1375, 4294901760
        %1377 = vmatprep.subr.mxu0 %v1376
        %v1378 = vand.u32 %v246, 4294901760
        %v1379 = vsub.f32 %v246, %v1378
        %v1380 = vand.u32 %v1379, 4294901760
        %1381 = vmatpush1.msra.mxu0 %v1380
        %v1382 = vand.u32 %v249, 4294901760
        %v1383 = vsub.f32 %v249, %v1382
        %v1384 = vand.u32 %v1383, 4294901760
        %1385 = vmatprep.subr.mxu0 %v1384
        %v1386 = vand.u32 %v248, 4294901760
        %v1387 = vsub.f32 %v248, %v1386
        %v1388 = vand.u32 %v1387, 4294901760
        %1389 = vmatpush1.msra.mxu0 %v1388
        %v1390 = vand.u32 %v251, 4294901760
        %v1391 = vsub.f32 %v251, %v1390
        %v1392 = vand.u32 %v1391, 4294901760
        %1393 = vmatprep.subr.mxu0 %v1392
        %v1394 = vand.u32 %v250, 4294901760
        %v1395 = vsub.f32 %v250, %v1394
        %v1396 = vand.u32 %v1395, 4294901760
        %1397 = vmatpush1.msra.mxu0 %v1396
        %v1398 = vand.u32 %v253, 4294901760
        %v1399 = vsub.f32 %v253, %v1398
        %v1400 = vand.u32 %v1399, 4294901760
        %1401 = vmatprep.subr.mxu0 %v1400
        %v1402 = vand.u32 %v252, 4294901760
        %v1403 = vsub.f32 %v252, %v1402
        %v1404 = vand.u32 %v1403, 4294901760
        %1405 = vmatpush1.msra.mxu0 %v1404
        %v1406 = vand.u32 %v255, 4294901760
        %v1407 = vsub.f32 %v255, %v1406
        %v1408 = vand.u32 %v1407, 4294901760
        %1409 = vmatprep.subr.mxu0 %v1408
        %v1410 = vand.u32 %v254, 4294901760
        %v1411 = vsub.f32 %v254, %v1410
        %v1412 = vand.u32 %v1411, 4294901760
        %1413 = vmatpush1.msra.mxu0 %v1412
        %v1414 = vand.u32 %v257, 4294901760
        %v1415 = vsub.f32 %v257, %v1414
        %v1416 = vand.u32 %v1415, 4294901760
        %1417 = vmatprep.subr.mxu0 %v1416
        %v1418 = vand.u32 %v256, 4294901760
        %v1419 = vsub.f32 %v256, %v1418
        %v1420 = vand.u32 %v1419, 4294901760
        %1421 = vmatpush1.msra.mxu0 %v1420
        %v1422 = vand.u32 %v259, 4294901760
        %v1423 = vsub.f32 %v259, %v1422
        %v1424 = vand.u32 %v1423, 4294901760
        %1425 = vmatprep.subr.mxu0 %v1424
        %v1426 = vand.u32 %v258, 4294901760
        %v1427 = vsub.f32 %v258, %v1426
        %v1428 = vand.u32 %v1427, 4294901760
        %1429 = vmatpush1.msra.mxu0 %v1428
        %v1430 = vand.u32 %v194, 4294901760
        %1431 = vmatprep.mubr.f32.mxu0 %v1430
        %v1432 = vand.u32 %v193, 4294901760
        %1433 = vmatmul.mubr.f32.gmra.mrb[0].mxu0 %v1432
        %v1434 = vpop.f32.mrb[0].mxu0
        %v1435 = vadd.f32 %v1170, %v1434
        %v1436 = vpop.f32.mrb[0].mxu0
        %v1437 = vadd.f32 %v1172, %v1436
        %1438 = vdwg.mxu0
        %v1439 = vand.u32 %v197, 4294901760
        %1440 = vmatprep.subr.mxu0 %v1439
        %v1441 = vand.u32 %v196, 4294901760
        %1442 = vmatpush1.msra.mxu0 %v1441
        %v1443 = vand.u32 %v199, 4294901760
        %1444 = vmatprep.subr.mxu0 %v1443
        %v1445 = vand.u32 %v198, 4294901760
        %1446 = vmatpush1.msra.mxu0 %v1445
        %v1447 = vand.u32 %v201, 4294901760
        %1448 = vmatprep.subr.mxu0 %v1447
        %v1449 = vand.u32 %v200, 4294901760
        %1450 = vmatpush1.msra.mxu0 %v1449
        %v1451 = vand.u32 %v203, 4294901760
        %1452 = vmatprep.subr.mxu0 %v1451
        %v1453 = vand.u32 %v202, 4294901760
        %1454 = vmatpush1.msra.mxu0 %v1453
        %v1455 = vand.u32 %v205, 4294901760
        %1456 = vmatprep.subr.mxu0 %v1455
        %v1457 = vand.u32 %v204, 4294901760
        %1458 = vmatpush1.msra.mxu0 %v1457
        %v1459 = vand.u32 %v207, 4294901760
        %1460 = vmatprep.subr.mxu0 %v1459
        %v1461 = vand.u32 %v206, 4294901760
        %1462 = vmatpush1.msra.mxu0 %v1461
        %v1463 = vand.u32 %v209, 4294901760
        %1464 = vmatprep.subr.mxu0 %v1463
        %v1465 = vand.u32 %v208, 4294901760
        %1466 = vmatpush1.msra.mxu0 %v1465
        %v1467 = vand.u32 %v211, 4294901760
        %1468 = vmatprep.subr.mxu0 %v1467
        %v1469 = vand.u32 %v210, 4294901760
        %1470 = vmatpush1.msra.mxu0 %v1469
        %v1471 = vand.u32 %v213, 4294901760
        %1472 = vmatprep.subr.mxu0 %v1471
        %v1473 = vand.u32 %v212, 4294901760
        %1474 = vmatpush1.msra.mxu0 %v1473
        %v1475 = vand.u32 %v215, 4294901760
        %1476 = vmatprep.subr.mxu0 %v1475
        %v1477 = vand.u32 %v214, 4294901760
        %1478 = vmatpush1.msra.mxu0 %v1477
        %v1479 = vand.u32 %v217, 4294901760
        %1480 = vmatprep.subr.mxu0 %v1479
        %v1481 = vand.u32 %v216, 4294901760
        %1482 = vmatpush1.msra.mxu0 %v1481
        %v1483 = vand.u32 %v219, 4294901760
        %1484 = vmatprep.subr.mxu0 %v1483
        %v1485 = vand.u32 %v218, 4294901760
        %1486 = vmatpush1.msra.mxu0 %v1485
        %v1487 = vand.u32 %v221, 4294901760
        %1488 = vmatprep.subr.mxu0 %v1487
        %v1489 = vand.u32 %v220, 4294901760
        %1490 = vmatpush1.msra.mxu0 %v1489
        %v1491 = vand.u32 %v223, 4294901760
        %1492 = vmatprep.subr.mxu0 %v1491
        %v1493 = vand.u32 %v222, 4294901760
        %1494 = vmatpush1.msra.mxu0 %v1493
        %v1495 = vand.u32 %v225, 4294901760
        %1496 = vmatprep.subr.mxu0 %v1495
        %v1497 = vand.u32 %v224, 4294901760
        %1498 = vmatpush1.msra.mxu0 %v1497
        %v1499 = vand.u32 %v227, 4294901760
        %1500 = vmatprep.subr.mxu0 %v1499
        %v1501 = vand.u32 %v226, 4294901760
        %1502 = vmatpush1.msra.mxu0 %v1501
        %v1503 = vand.u32 %v229, 4294901760
        %1504 = vmatprep.subr.mxu0 %v1503
        %v1505 = vand.u32 %v228, 4294901760
        %1506 = vmatpush1.msra.mxu0 %v1505
        %v1507 = vand.u32 %v231, 4294901760
        %1508 = vmatprep.subr.mxu0 %v1507
        %v1509 = vand.u32 %v230, 4294901760
        %1510 = vmatpush1.msra.mxu0 %v1509
        %v1511 = vand.u32 %v233, 4294901760
        %1512 = vmatprep.subr.mxu0 %v1511
        %v1513 = vand.u32 %v232, 4294901760
        %1514 = vmatpush1.msra.mxu0 %v1513
        %v1515 = vand.u32 %v235, 4294901760
        %1516 = vmatprep.subr.mxu0 %v1515
        %v1517 = vand.u32 %v234, 4294901760
        %1518 = vmatpush1.msra.mxu0 %v1517
        %v1519 = vand.u32 %v237, 4294901760
        %1520 = vmatprep.subr.mxu0 %v1519
        %v1521 = vand.u32 %v236, 4294901760
        %1522 = vmatpush1.msra.mxu0 %v1521
        %v1523 = vand.u32 %v239, 4294901760
        %1524 = vmatprep.subr.mxu0 %v1523
        %v1525 = vand.u32 %v238, 4294901760
        %1526 = vmatpush1.msra.mxu0 %v1525
        %v1527 = vand.u32 %v241, 4294901760
        %1528 = vmatprep.subr.mxu0 %v1527
        %v1529 = vand.u32 %v240, 4294901760
        %1530 = vmatpush1.msra.mxu0 %v1529
        %v1531 = vand.u32 %v243, 4294901760
        %1532 = vmatprep.subr.mxu0 %v1531
        %v1533 = vand.u32 %v242, 4294901760
        %1534 = vmatpush1.msra.mxu0 %v1533
        %v1535 = vand.u32 %v245, 4294901760
        %1536 = vmatprep.subr.mxu0 %v1535
        %v1537 = vand.u32 %v244, 4294901760
        %1538 = vmatpush1.msra.mxu0 %v1537
        %v1539 = vand.u32 %v247, 4294901760
        %1540 = vmatprep.subr.mxu0 %v1539
        %v1541 = vand.u32 %v246, 4294901760
        %1542 = vmatpush1.msra.mxu0 %v1541
        %v1543 = vand.u32 %v249, 4294901760
        %1544 = vmatprep.subr.mxu0 %v1543
        %v1545 = vand.u32 %v248, 4294901760
        %1546 = vmatpush1.msra.mxu0 %v1545
        %v1547 = vand.u32 %v251, 4294901760
        %1548 = vmatprep.subr.mxu0 %v1547
        %v1549 = vand.u32 %v250, 4294901760
        %1550 = vmatpush1.msra.mxu0 %v1549
        %v1551 = vand.u32 %v253, 4294901760
        %1552 = vmatprep.subr.mxu0 %v1551
        %v1553 = vand.u32 %v252, 4294901760
        %1554 = vmatpush1.msra.mxu0 %v1553
        %v1555 = vand.u32 %v255, 4294901760
        %1556 = vmatprep.subr.mxu0 %v1555
        %v1557 = vand.u32 %v254, 4294901760
        %1558 = vmatpush1.msra.mxu0 %v1557
        %v1559 = vand.u32 %v257, 4294901760
        %1560 = vmatprep.subr.mxu0 %v1559
        %v1561 = vand.u32 %v256, 4294901760
        %1562 = vmatpush1.msra.mxu0 %v1561
        %v1563 = vand.u32 %v259, 4294901760
        %1564 = vmatprep.subr.mxu0 %v1563
        %v1565 = vand.u32 %v258, 4294901760
        %1566 = vmatpush1.msra.mxu0 %v1565
        %v1567 = vand.u32 %v194, 4294901760
        %1568 = vmatprep.mubr.f32.mxu0 %v1567
        %v1569 = vand.u32 %v193, 4294901760
        %1570 = vmatmul.mubr.f32.gmra.mrb[0].mxu0 %v1569
        %v1571 = vpop.f32.mrb[0].mxu0
        %v1572 = vadd.f32 %v1435, %v1571
        %v1573 = vpop.f32.mrb[0].mxu0
        %v1574 = vadd.f32 %v1437, %v1573
        %1575 = vdwg.mxu0
        %v1576 = vand.u32 %v261, 4294901760
        %1577 = vmatprep.subr.mxu0 %v1576
        %v1578 = vand.u32 %v260, 4294901760
        %1579 = vmatpush1.msra.mxu0 %v1578
        %v1580 = vand.u32 %v263, 4294901760
        %1581 = vmatprep.subr.mxu0 %v1580
        %v1582 = vand.u32 %v262, 4294901760
        %1583 = vmatpush1.msra.mxu0 %v1582
        %v1584 = vand.u32 %v265, 4294901760
        %1585 = vmatprep.subr.mxu0 %v1584
        %v1586 = vand.u32 %v264, 4294901760
        %1587 = vmatpush1.msra.mxu0 %v1586
        %v1588 = vand.u32 %v267, 4294901760
        %1589 = vmatprep.subr.mxu0 %v1588
        %v1590 = vand.u32 %v266, 4294901760
        %1591 = vmatpush1.msra.mxu0 %v1590
        %v1592 = vand.u32 %v269, 4294901760
        %1593 = vmatprep.subr.mxu0 %v1592
        %v1594 = vand.u32 %v268, 4294901760
        %1595 = vmatpush1.msra.mxu0 %v1594
        %v1596 = vand.u32 %v271, 4294901760
        %1597 = vmatprep.subr.mxu0 %v1596
        %v1598 = vand.u32 %v270, 4294901760
        %1599 = vmatpush1.msra.mxu0 %v1598
        %v1600 = vand.u32 %v273, 4294901760
        %1601 = vmatprep.subr.mxu0 %v1600
        %v1602 = vand.u32 %v272, 4294901760
        %1603 = vmatpush1.msra.mxu0 %v1602
        %v1604 = vand.u32 %v275, 4294901760
        %1605 = vmatprep.subr.mxu0 %v1604
        %v1606 = vand.u32 %v274, 4294901760
        %1607 = vmatpush1.msra.mxu0 %v1606
        %v1608 = vand.u32 %v277, 4294901760
        %1609 = vmatprep.subr.mxu0 %v1608
        %v1610 = vand.u32 %v276, 4294901760
        %1611 = vmatpush1.msra.mxu0 %v1610
        %v1612 = vand.u32 %v279, 4294901760
        %1613 = vmatprep.subr.mxu0 %v1612
        %v1614 = vand.u32 %v278, 4294901760
        %1615 = vmatpush1.msra.mxu0 %v1614
        %v1616 = vand.u32 %v281, 4294901760
        %1617 = vmatprep.subr.mxu0 %v1616
        %v1618 = vand.u32 %v280, 4294901760
        %1619 = vmatpush1.msra.mxu0 %v1618
        %v1620 = vand.u32 %v283, 4294901760
        %1621 = vmatprep.subr.mxu0 %v1620
        %v1622 = vand.u32 %v282, 4294901760
        %1623 = vmatpush1.msra.mxu0 %v1622
        %v1624 = vand.u32 %v285, 4294901760
        %1625 = vmatprep.subr.mxu0 %v1624
        %v1626 = vand.u32 %v284, 4294901760
        %1627 = vmatpush1.msra.mxu0 %v1626
        %v1628 = vand.u32 %v287, 4294901760
        %1629 = vmatprep.subr.mxu0 %v1628
        %v1630 = vand.u32 %v286, 4294901760
        %1631 = vmatpush1.msra.mxu0 %v1630
        %v1632 = vand.u32 %v289, 4294901760
        %1633 = vmatprep.subr.mxu0 %v1632
        %v1634 = vand.u32 %v288, 4294901760
        %1635 = vmatpush1.msra.mxu0 %v1634
        %v1636 = vand.u32 %v291, 4294901760
        %1637 = vmatprep.subr.mxu0 %v1636
        %v1638 = vand.u32 %v290, 4294901760
        %1639 = vmatpush1.msra.mxu0 %v1638
        %1640 = vmatprep.subr.mxu0 0.0
        %1641 = vmatpush1.msra.mxu0 0.0
        %1642 = vmatprep.subr.mxu0 0.0
        %1643 = vmatpush1.msra.mxu0 0.0
        %1644 = vmatprep.subr.mxu0 0.0
        %1645 = vmatpush1.msra.mxu0 0.0
        %1646 = vmatprep.subr.mxu0 0.0
        %1647 = vmatpush1.msra.mxu0 0.0
        %1648 = vmatprep.subr.mxu0 0.0
        %1649 = vmatpush1.msra.mxu0 0.0
        %1650 = vmatprep.subr.mxu0 0.0
        %1651 = vmatpush1.msra.mxu0 0.0
        %1652 = vmatprep.subr.mxu0 0.0
        %1653 = vmatpush1.msra.mxu0 0.0
        %1654 = vmatprep.subr.mxu0 0.0
        %1655 = vmatpush1.msra.mxu0 0.0
        %1656 = vmatprep.subr.mxu0 0.0
        %1657 = vmatpush1.msra.mxu0 0.0
        %1658 = vmatprep.subr.mxu0 0.0
        %1659 = vmatpush1.msra.mxu0 0.0
        %1660 = vmatprep.subr.mxu0 0.0
        %1661 = vmatpush1.msra.mxu0 0.0
        %1662 = vmatprep.subr.mxu0 0.0
        %1663 = vmatpush1.msra.mxu0 0.0
        %1664 = vmatprep.subr.mxu0 0.0
        %1665 = vmatpush1.msra.mxu0 0.0
        %1666 = vmatprep.subr.mxu0 0.0
        %1667 = vmatpush1.msra.mxu0 0.0
        %1668 = vmatprep.subr.mxu0 0.0
        %1669 = vmatpush1.msra.mxu0 0.0
        %1670 = vmatprep.subr.mxu0 0.0
        %1671 = vmatpush1.msra.mxu0 0.0
        %1672 = vmatprep.mubr.f32.mxu0 0.0
        %v1673 = vand.u32 %v195, 4294901760
        %v1674 = vsub.f32 %v195, %v1673
        %v1675 = vand.u32 %v1674, 4294901760
        %v1676 = vsub.f32 %v1674, %v1675
        %v1677 = vand.u32 %v1676, 4294901760
        %1678 = vmatmul.mubr.f32.gmra.mrb[0].mxu0 %v1677
        %v1679 = vpop.f32.mrb[0].mxu0
        %v1680 = vadd.f32 %v1572, %v1679
        %v1681 = vpop.f32.mrb[0].mxu0
        %v1682 = vadd.f32 %v1574, %v1681
        %1683 = vdwg.mxu0
        %v1684 = vand.u32 %v261, 4294901760
        %v1685 = vsub.f32 %v261, %v1684
        %v1686 = vand.u32 %v1685, 4294901760
        %v1687 = vsub.f32 %v1685, %v1686
        %v1688 = vand.u32 %v1687, 4294901760
        %1689 = vmatprep.subr.mxu0 %v1688
        %v1690 = vand.u32 %v260, 4294901760
        %v1691 = vsub.f32 %v260, %v1690
        %v1692 = vand.u32 %v1691, 4294901760
        %v1693 = vsub.f32 %v1691, %v1692
        %v1694 = vand.u32 %v1693, 4294901760
        %1695 = vmatpush1.msra.mxu0 %v1694
        %v1696 = vand.u32 %v263, 4294901760
        %v1697 = vsub.f32 %v263, %v1696
        %v1698 = vand.u32 %v1697, 4294901760
        %v1699 = vsub.f32 %v1697, %v1698
        %v1700 = vand.u32 %v1699, 4294901760
        %1701 = vmatprep.subr.mxu0 %v1700
        %v1702 = vand.u32 %v262, 4294901760
        %v1703 = vsub.f32 %v262, %v1702
        %v1704 = vand.u32 %v1703, 4294901760
        %v1705 = vsub.f32 %v1703, %v1704
        %v1706 = vand.u32 %v1705, 4294901760
        %1707 = vmatpush1.msra.mxu0 %v1706
        %v1708 = vand.u32 %v265, 4294901760
        %v1709 = vsub.f32 %v265, %v1708
        %v1710 = vand.u32 %v1709, 4294901760
        %v1711 = vsub.f32 %v1709, %v1710
        %v1712 = vand.u32 %v1711, 4294901760
        %1713 = vmatprep.subr.mxu0 %v1712
        %v1714 = vand.u32 %v264, 4294901760
        %v1715 = vsub.f32 %v264, %v1714
        %v1716 = vand.u32 %v1715, 4294901760
        %v1717 = vsub.f32 %v1715, %v1716
        %v1718 = vand.u32 %v1717, 4294901760
        %1719 = vmatpush1.msra.mxu0 %v1718
        %v1720 = vand.u32 %v267, 4294901760
        %v1721 = vsub.f32 %v267, %v1720
        %v1722 = vand.u32 %v1721, 4294901760
        %v1723 = vsub.f32 %v1721, %v1722
        %v1724 = vand.u32 %v1723, 4294901760
        %1725 = vmatprep.subr.mxu0 %v1724
        %v1726 = vand.u32 %v266, 4294901760
        %v1727 = vsub.f32 %v266, %v1726
        %v1728 = vand.u32 %v1727, 4294901760
        %v1729 = vsub.f32 %v1727, %v1728
        %v1730 = vand.u32 %v1729, 4294901760
        %1731 = vmatpush1.msra.mxu0 %v1730
        %v1732 = vand.u32 %v269, 4294901760
        %v1733 = vsub.f32 %v269, %v1732
        %v1734 = vand.u32 %v1733, 4294901760
        %v1735 = vsub.f32 %v1733, %v1734
        %v1736 = vand.u32 %v1735, 4294901760
        %1737 = vmatprep.subr.mxu0 %v1736
        %v1738 = vand.u32 %v268, 4294901760
        %v1739 = vsub.f32 %v268, %v1738
        %v1740 = vand.u32 %v1739, 4294901760
        %v1741 = vsub.f32 %v1739, %v1740
        %v1742 = vand.u32 %v1741, 4294901760
        %1743 = vmatpush1.msra.mxu0 %v1742
        %v1744 = vand.u32 %v271, 4294901760
        %v1745 = vsub.f32 %v271, %v1744
        %v1746 = vand.u32 %v1745, 4294901760
        %v1747 = vsub.f32 %v1745, %v1746
        %v1748 = vand.u32 %v1747, 4294901760
        %1749 = vmatprep.subr.mxu0 %v1748
        %v1750 = vand.u32 %v270, 4294901760
        %v1751 = vsub.f32 %v270, %v1750
        %v1752 = vand.u32 %v1751, 4294901760
        %v1753 = vsub.f32 %v1751, %v1752
        %v1754 = vand.u32 %v1753, 4294901760
        %1755 = vmatpush1.msra.mxu0 %v1754
        %v1756 = vand.u32 %v273, 4294901760
        %v1757 = vsub.f32 %v273, %v1756
        %v1758 = vand.u32 %v1757, 4294901760
        %v1759 = vsub.f32 %v1757, %v1758
        %v1760 = vand.u32 %v1759, 4294901760
        %1761 = vmatprep.subr.mxu0 %v1760
        %v1762 = vand.u32 %v272, 4294901760
        %v1763 = vsub.f32 %v272, %v1762
        %v1764 = vand.u32 %v1763, 4294901760
        %v1765 = vsub.f32 %v1763, %v1764
        %v1766 = vand.u32 %v1765, 4294901760
        %1767 = vmatpush1.msra.mxu0 %v1766
        %v1768 = vand.u32 %v275, 4294901760
        %v1769 = vsub.f32 %v275, %v1768
        %v1770 = vand.u32 %v1769, 4294901760
        %v1771 = vsub.f32 %v1769, %v1770
        %v1772 = vand.u32 %v1771, 4294901760
        %1773 = vmatprep.subr.mxu0 %v1772
        %v1774 = vand.u32 %v274, 4294901760
        %v1775 = vsub.f32 %v274, %v1774
        %v1776 = vand.u32 %v1775, 4294901760
        %v1777 = vsub.f32 %v1775, %v1776
        %v1778 = vand.u32 %v1777, 4294901760
        %1779 = vmatpush1.msra.mxu0 %v1778
        %v1780 = vand.u32 %v277, 4294901760
        %v1781 = vsub.f32 %v277, %v1780
        %v1782 = vand.u32 %v1781, 4294901760
        %v1783 = vsub.f32 %v1781, %v1782
        %v1784 = vand.u32 %v1783, 4294901760
        %1785 = vmatprep.subr.mxu0 %v1784
        %v1786 = vand.u32 %v276, 4294901760
        %v1787 = vsub.f32 %v276, %v1786
        %v1788 = vand.u32 %v1787, 4294901760
        %v1789 = vsub.f32 %v1787, %v1788
        %v1790 = vand.u32 %v1789, 4294901760
        %1791 = vmatpush1.msra.mxu0 %v1790
        %v1792 = vand.u32 %v279, 4294901760
        %v1793 = vsub.f32 %v279, %v1792
        %v1794 = vand.u32 %v1793, 4294901760
        %v1795 = vsub.f32 %v1793, %v1794
        %v1796 = vand.u32 %v1795, 4294901760
        %1797 = vmatprep.subr.mxu0 %v1796
        %v1798 = vand.u32 %v278, 4294901760
        %v1799 = vsub.f32 %v278, %v1798
        %v1800 = vand.u32 %v1799, 4294901760
        %v1801 = vsub.f32 %v1799, %v1800
        %v1802 = vand.u32 %v1801, 4294901760
        %1803 = vmatpush1.msra.mxu0 %v1802
        %v1804 = vand.u32 %v281, 4294901760
        %v1805 = vsub.f32 %v281, %v1804
        %v1806 = vand.u32 %v1805, 4294901760
        %v1807 = vsub.f32 %v1805, %v1806
        %v1808 = vand.u32 %v1807, 4294901760
        %1809 = vmatprep.subr.mxu0 %v1808
        %v1810 = vand.u32 %v280, 4294901760
        %v1811 = vsub.f32 %v280, %v1810
        %v1812 = vand.u32 %v1811, 4294901760
        %v1813 = vsub.f32 %v1811, %v1812
        %v1814 = vand.u32 %v1813, 4294901760
        %1815 = vmatpush1.msra.mxu0 %v1814
        %v1816 = vand.u32 %v283, 4294901760
        %v1817 = vsub.f32 %v283, %v1816
        %v1818 = vand.u32 %v1817, 4294901760
        %v1819 = vsub.f32 %v1817, %v1818
        %v1820 = vand.u32 %v1819, 4294901760
        %1821 = vmatprep.subr.mxu0 %v1820
        %v1822 = vand.u32 %v282, 4294901760
        %v1823 = vsub.f32 %v282, %v1822
        %v1824 = vand.u32 %v1823, 4294901760
        %v1825 = vsub.f32 %v1823, %v1824
        %v1826 = vand.u32 %v1825, 4294901760
        %1827 = vmatpush1.msra.mxu0 %v1826
        %v1828 = vand.u32 %v285, 4294901760
        %v1829 = vsub.f32 %v285, %v1828
        %v1830 = vand.u32 %v1829, 4294901760
        %v1831 = vsub.f32 %v1829, %v1830
        %v1832 = vand.u32 %v1831, 4294901760
        %1833 = vmatprep.subr.mxu0 %v1832
        %v1834 = vand.u32 %v284, 4294901760
        %v1835 = vsub.f32 %v284, %v1834
        %v1836 = vand.u32 %v1835, 4294901760
        %v1837 = vsub.f32 %v1835, %v1836
        %v1838 = vand.u32 %v1837, 4294901760
        %1839 = vmatpush1.msra.mxu0 %v1838
        %v1840 = vand.u32 %v287, 4294901760
        %v1841 = vsub.f32 %v287, %v1840
        %v1842 = vand.u32 %v1841, 4294901760
        %v1843 = vsub.f32 %v1841, %v1842
        %v1844 = vand.u32 %v1843, 4294901760
        %1845 = vmatprep.subr.mxu0 %v1844
        %v1846 = vand.u32 %v286, 4294901760
        %v1847 = vsub.f32 %v286, %v1846
        %v1848 = vand.u32 %v1847, 4294901760
        %v1849 = vsub.f32 %v1847, %v1848
        %v1850 = vand.u32 %v1849, 4294901760
        %1851 = vmatpush1.msra.mxu0 %v1850
        %v1852 = vand.u32 %v289, 4294901760
        %v1853 = vsub.f32 %v289, %v1852
        %v1854 = vand.u32 %v1853, 4294901760
        %v1855 = vsub.f32 %v1853, %v1854
        %v1856 = vand.u32 %v1855, 4294901760
        %1857 = vmatprep.subr.mxu0 %v1856
        %v1858 = vand.u32 %v288, 4294901760
        %v1859 = vsub.f32 %v288, %v1858
        %v1860 = vand.u32 %v1859, 4294901760
        %v1861 = vsub.f32 %v1859, %v1860
        %v1862 = vand.u32 %v1861, 4294901760
        %1863 = vmatpush1.msra.mxu0 %v1862
        %v1864 = vand.u32 %v291, 4294901760
        %v1865 = vsub.f32 %v291, %v1864
        %v1866 = vand.u32 %v1865, 4294901760
        %v1867 = vsub.f32 %v1865, %v1866
        %v1868 = vand.u32 %v1867, 4294901760
        %1869 = vmatprep.subr.mxu0 %v1868
        %v1870 = vand.u32 %v290, 4294901760
        %v1871 = vsub.f32 %v290, %v1870
        %v1872 = vand.u32 %v1871, 4294901760
        %v1873 = vsub.f32 %v1871, %v1872
        %v1874 = vand.u32 %v1873, 4294901760
        %1875 = vmatpush1.msra.mxu0 %v1874
        %1876 = vmatprep.subr.mxu0 0.0
        %1877 = vmatpush1.msra.mxu0 0.0
        %1878 = vmatprep.subr.mxu0 0.0
        %1879 = vmatpush1.msra.mxu0 0.0
        %1880 = vmatprep.subr.mxu0 0.0
        %1881 = vmatpush1.msra.mxu0 0.0
        %1882 = vmatprep.subr.mxu0 0.0
        %1883 = vmatpush1.msra.mxu0 0.0
        %1884 = vmatprep.subr.mxu0 0.0
        %1885 = vmatpush1.msra.mxu0 0.0
        %1886 = vmatprep.subr.mxu0 0.0
        %1887 = vmatpush1.msra.mxu0 0.0
        %1888 = vmatprep.subr.mxu0 0.0
        %1889 = vmatpush1.msra.mxu0 0.0
        %1890 = vmatprep.subr.mxu0 0.0
        %1891 = vmatpush1.msra.mxu0 0.0
        %1892 = vmatprep.subr.mxu0 0.0
        %1893 = vmatpush1.msra.mxu0 0.0
        %1894 = vmatprep.subr.mxu0 0.0
        %1895 = vmatpush1.msra.mxu0 0.0
        %1896 = vmatprep.subr.mxu0 0.0
        %1897 = vmatpush1.msra.mxu0 0.0
        %1898 = vmatprep.subr.mxu0 0.0
        %1899 = vmatpush1.msra.mxu0 0.0
        %1900 = vmatprep.subr.mxu0 0.0
        %1901 = vmatpush1.msra.mxu0 0.0
        %1902 = vmatprep.subr.mxu0 0.0
        %1903 = vmatpush1.msra.mxu0 0.0
        %1904 = vmatprep.subr.mxu0 0.0
        %1905 = vmatpush1.msra.mxu0 0.0
        %1906 = vmatprep.subr.mxu0 0.0
        %1907 = vmatpush1.msra.mxu0 0.0
        %1908 = vmatprep.mubr.f32.mxu0 0.0
        %v1909 = vand.u32 %v195, 4294901760
        %1910 = vmatmul.mubr.f32.gmra.mrb[0].mxu0 %v1909
        %v1911 = vpop.f32.mrb[0].mxu0
        %v1912 = vadd.f32 %v1680, %v1911
        %v1913 = vpop.f32.mrb[0].mxu0
        %v1914 = vadd.f32 %v1682, %v1913
        %1915 = vdwg.mxu0
        %v1916 = vand.u32 %v261, 4294901760
        %v1917 = vsub.f32 %v261, %v1916
        %1918 = vmatprep.subr.mxu0 %v1917
        %v1919 = vand.u32 %v260, 4294901760
        %v1920 = vsub.f32 %v260, %v1919
        %1921 = vmatpush1.msra.mxu0 %v1920
        %v1922 = vand.u32 %v263, 4294901760
        %v1923 = vsub.f32 %v263, %v1922
        %1924 = vmatprep.subr.mxu0 %v1923
        %v1925 = vand.u32 %v262, 4294901760
        %v1926 = vsub.f32 %v262, %v1925
        %1927 = vmatpush1.msra.mxu0 %v1926
        %v1928 = vand.u32 %v265, 4294901760
        %v1929 = vsub.f32 %v265, %v1928
        %1930 = vmatprep.subr.mxu0 %v1929
        %v1931 = vand.u32 %v264, 4294901760
        %v1932 = vsub.f32 %v264, %v1931
        %1933 = vmatpush1.msra.mxu0 %v1932
        %v1934 = vand.u32 %v267, 4294901760
        %v1935 = vsub.f32 %v267, %v1934
        %1936 = vmatprep.subr.mxu0 %v1935
        %v1937 = vand.u32 %v266, 4294901760
        %v1938 = vsub.f32 %v266, %v1937
        %1939 = vmatpush1.msra.mxu0 %v1938
        %v1940 = vand.u32 %v269, 4294901760
        %v1941 = vsub.f32 %v269, %v1940
        %1942 = vmatprep.subr.mxu0 %v1941
        %v1943 = vand.u32 %v268, 4294901760
        %v1944 = vsub.f32 %v268, %v1943
        %1945 = vmatpush1.msra.mxu0 %v1944
        %v1946 = vand.u32 %v271, 4294901760
        %v1947 = vsub.f32 %v271, %v1946
        %1948 = vmatprep.subr.mxu0 %v1947
        %v1949 = vand.u32 %v270, 4294901760
        %v1950 = vsub.f32 %v270, %v1949
        %1951 = vmatpush1.msra.mxu0 %v1950
        %v1952 = vand.u32 %v273, 4294901760
        %v1953 = vsub.f32 %v273, %v1952
        %1954 = vmatprep.subr.mxu0 %v1953
        %v1955 = vand.u32 %v272, 4294901760
        %v1956 = vsub.f32 %v272, %v1955
        %1957 = vmatpush1.msra.mxu0 %v1956
        %v1958 = vand.u32 %v275, 4294901760
        %v1959 = vsub.f32 %v275, %v1958
        %1960 = vmatprep.subr.mxu0 %v1959
        %v1961 = vand.u32 %v274, 4294901760
        %v1962 = vsub.f32 %v274, %v1961
        %1963 = vmatpush1.msra.mxu0 %v1962
        %v1964 = vand.u32 %v277, 4294901760
        %v1965 = vsub.f32 %v277, %v1964
        %1966 = vmatprep.subr.mxu0 %v1965
        %v1967 = vand.u32 %v276, 4294901760
        %v1968 = vsub.f32 %v276, %v1967
        %1969 = vmatpush1.msra.mxu0 %v1968
        %v1970 = vand.u32 %v279, 4294901760
        %v1971 = vsub.f32 %v279, %v1970
        %1972 = vmatprep.subr.mxu0 %v1971
        %v1973 = vand.u32 %v278, 4294901760
        %v1974 = vsub.f32 %v278, %v1973
        %1975 = vmatpush1.msra.mxu0 %v1974
        %v1976 = vand.u32 %v281, 4294901760
        %v1977 = vsub.f32 %v281, %v1976
        %1978 = vmatprep.subr.mxu0 %v1977
        %v1979 = vand.u32 %v280, 4294901760
        %v1980 = vsub.f32 %v280, %v1979
        %1981 = vmatpush1.msra.mxu0 %v1980
        %v1982 = vand.u32 %v283, 4294901760
        %v1983 = vsub.f32 %v283, %v1982
        %1984 = vmatprep.subr.mxu0 %v1983
        %v1985 = vand.u32 %v282, 4294901760
        %v1986 = vsub.f32 %v282, %v1985
        %1987 = vmatpush1.msra.mxu0 %v1986
        %v1988 = vand.u32 %v285, 4294901760
        %v1989 = vsub.f32 %v285, %v1988
        %1990 = vmatprep.subr.mxu0 %v1989
        %v1991 = vand.u32 %v284, 4294901760
        %v1992 = vsub.f32 %v284, %v1991
        %1993 = vmatpush1.msra.mxu0 %v1992
        %v1994 = vand.u32 %v287, 4294901760
        %v1995 = vsub.f32 %v287, %v1994
        %1996 = vmatprep.subr.mxu0 %v1995
        %v1997 = vand.u32 %v286, 4294901760
        %v1998 = vsub.f32 %v286, %v1997
        %1999 = vmatpush1.msra.mxu0 %v1998
        %v2000 = vand.u32 %v289, 4294901760
        %v2001 = vsub.f32 %v289, %v2000
        %2002 = vmatprep.subr.mxu0 %v2001
        %v2003 = vand.u32 %v288, 4294901760
        %v2004 = vsub.f32 %v288, %v2003
        %2005 = vmatpush1.msra.mxu0 %v2004
        %v2006 = vand.u32 %v291, 4294901760
        %v2007 = vsub.f32 %v291, %v2006
        %2008 = vmatprep.subr.mxu0 %v2007
        %v2009 = vand.u32 %v290, 4294901760
        %v2010 = vsub.f32 %v290, %v2009
        %2011 = vmatpush1.msra.mxu0 %v2010
        %2012 = vmatprep.subr.mxu0 0.0
        %2013 = vmatpush1.msra.mxu0 0.0
        %2014 = vmatprep.subr.mxu0 0.0
        %2015 = vmatpush1.msra.mxu0 0.0
        %2016 = vmatprep.subr.mxu0 0.0
        %2017 = vmatpush1.msra.mxu0 0.0
        %2018 = vmatprep.subr.mxu0 0.0
        %2019 = vmatpush1.msra.mxu0 0.0
        %2020 = vmatprep.subr.mxu0 0.0
        %2021 = vmatpush1.msra.mxu0 0.0
        %2022 = vmatprep.subr.mxu0 0.0
        %2023 = vmatpush1.msra.mxu0 0.0
        %2024 = vmatprep.subr.mxu0 0.0
        %2025 = vmatpush1.msra.mxu0 0.0
        %2026 = vmatprep.subr.mxu0 0.0
        %2027 = vmatpush1.msra.mxu0 0.0
        %2028 = vmatprep.subr.mxu0 0.0
        %2029 = vmatpush1.msra.mxu0 0.0
        %2030 = vmatprep.subr.mxu0 0.0
        %2031 = vmatpush1.msra.mxu0 0.0
        %2032 = vmatprep.subr.mxu0 0.0
        %2033 = vmatpush1.msra.mxu0 0.0
        %2034 = vmatprep.subr.mxu0 0.0
        %2035 = vmatpush1.msra.mxu0 0.0
        %2036 = vmatprep.subr.mxu0 0.0
        %2037 = vmatpush1.msra.mxu0 0.0
        %2038 = vmatprep.subr.mxu0 0.0
        %2039 = vmatpush1.msra.mxu0 0.0
        %2040 = vmatprep.subr.mxu0 0.0
        %2041 = vmatpush1.msra.mxu0 0.0
        %2042 = vmatprep.subr.mxu0 0.0
        %2043 = vmatpush1.msra.mxu0 0.0
        %2044 = vmatprep.mubr.f32.mxu0 0.0
        %v2045 = vand.u32 %v195, 4294901760
        %v2046 = vsub.f32 %v195, %v2045
        %2047 = vmatmul.mubr.f32.gmra.mrb[0].mxu0 %v2046
        %v2048 = vpop.f32.mrb[0].mxu0
        %v2049 = vadd.f32 %v1912, %v2048
        %v2050 = vpop.f32.mrb[0].mxu0
        %v2051 = vadd.f32 %v1914, %v2050
        %2052 = vdwg.mxu0
        %v2053 = vand.u32 %v261, 4294901760
        %2054 = vmatprep.subr.mxu0 %v2053
        %v2055 = vand.u32 %v260, 4294901760
        %2056 = vmatpush1.msra.mxu0 %v2055
        %v2057 = vand.u32 %v263, 4294901760
        %2058 = vmatprep.subr.mxu0 %v2057
        %v2059 = vand.u32 %v262, 4294901760
        %2060 = vmatpush1.msra.mxu0 %v2059
        %v2061 = vand.u32 %v265, 4294901760
        %2062 = vmatprep.subr.mxu0 %v2061
        %v2063 = vand.u32 %v264, 4294901760
        %2064 = vmatpush1.msra.mxu0 %v2063
        %v2065 = vand.u32 %v267, 4294901760
        %2066 = vmatprep.subr.mxu0 %v2065
        %v2067 = vand.u32 %v266, 4294901760
        %2068 = vmatpush1.msra.mxu0 %v2067
        %v2069 = vand.u32 %v269, 4294901760
        %2070 = vmatprep.subr.mxu0 %v2069
        %v2071 = vand.u32 %v268, 4294901760
        %2072 = vmatpush1.msra.mxu0 %v2071
        %v2073 = vand.u32 %v271, 4294901760
        %2074 = vmatprep.subr.mxu0 %v2073
        %v2075 = vand.u32 %v270, 4294901760
        %2076 = vmatpush1.msra.mxu0 %v2075
        %v2077 = vand.u32 %v273, 4294901760
        %2078 = vmatprep.subr.mxu0 %v2077
        %v2079 = vand.u32 %v272, 4294901760
        %2080 = vmatpush1.msra.mxu0 %v2079
        %v2081 = vand.u32 %v275, 4294901760
        %2082 = vmatprep.subr.mxu0 %v2081
        %v2083 = vand.u32 %v274, 4294901760
        %2084 = vmatpush1.msra.mxu0 %v2083
        %v2085 = vand.u32 %v277, 4294901760
        %2086 = vmatprep.subr.mxu0 %v2085
        %v2087 = vand.u32 %v276, 4294901760
        %2088 = vmatpush1.msra.mxu0 %v2087
        %v2089 = vand.u32 %v279, 4294901760
        %2090 = vmatprep.subr.mxu0 %v2089
        %v2091 = vand.u32 %v278, 4294901760
        %2092 = vmatpush1.msra.mxu0 %v2091
        %v2093 = vand.u32 %v281, 4294901760
        %2094 = vmatprep.subr.mxu0 %v2093
        %v2095 = vand.u32 %v280, 4294901760
        %2096 = vmatpush1.msra.mxu0 %v2095
        %v2097 = vand.u32 %v283, 4294901760
        %2098 = vmatprep.subr.mxu0 %v2097
        %v2099 = vand.u32 %v282, 4294901760
        %2100 = vmatpush1.msra.mxu0 %v2099
        %v2101 = vand.u32 %v285, 4294901760
        %2102 = vmatprep.subr.mxu0 %v2101
        %v2103 = vand.u32 %v284, 4294901760
        %2104 = vmatpush1.msra.mxu0 %v2103
        %v2105 = vand.u32 %v287, 4294901760
        %2106 = vmatprep.subr.mxu0 %v2105
        %v2107 = vand.u32 %v286, 4294901760
        %2108 = vmatpush1.msra.mxu0 %v2107
        %v2109 = vand.u32 %v289, 4294901760
        %2110 = vmatprep.subr.mxu0 %v2109
        %v2111 = vand.u32 %v288, 4294901760
        %2112 = vmatpush1.msra.mxu0 %v2111
        %v2113 = vand.u32 %v291, 4294901760
        %2114 = vmatprep.subr.mxu0 %v2113
        %v2115 = vand.u32 %v290, 4294901760
        %2116 = vmatpush1.msra.mxu0 %v2115
        %2117 = vmatprep.subr.mxu0 0.0
        %2118 = vmatpush1.msra.mxu0 0.0
        %2119 = vmatprep.subr.mxu0 0.0
        %2120 = vmatpush1.msra.mxu0 0.0
        %2121 = vmatprep.subr.mxu0 0.0
        %2122 = vmatpush1.msra.mxu0 0.0
        %2123 = vmatprep.subr.mxu0 0.0
        %2124 = vmatpush1.msra.mxu0 0.0
        %2125 = vmatprep.subr.mxu0 0.0
        %2126 = vmatpush1.msra.mxu0 0.0
        %2127 = vmatprep.subr.mxu0 0.0
        %2128 = vmatpush1.msra.mxu0 0.0
        %2129 = vmatprep.subr.mxu0 0.0
        %2130 = vmatpush1.msra.mxu0 0.0
        %2131 = vmatprep.subr.mxu0 0.0
        %2132 = vmatpush1.msra.mxu0 0.0
        %2133 = vmatprep.subr.mxu0 0.0
        %2134 = vmatpush1.msra.mxu0 0.0
        %2135 = vmatprep.subr.mxu0 0.0
        %2136 = vmatpush1.msra.mxu0 0.0
        %2137 = vmatprep.subr.mxu0 0.0
        %2138 = vmatpush1.msra.mxu0 0.0
        %2139 = vmatprep.subr.mxu0 0.0
        %2140 = vmatpush1.msra.mxu0 0.0
        %2141 = vmatprep.subr.mxu0 0.0
        %2142 = vmatpush1.msra.mxu0 0.0
        %2143 = vmatprep.subr.mxu0 0.0
        %2144 = vmatpush1.msra.mxu0 0.0
        %2145 = vmatprep.subr.mxu0 0.0
        %2146 = vmatpush1.msra.mxu0 0.0
        %2147 = vmatprep.subr.mxu0 0.0
        %2148 = vmatpush1.msra.mxu0 0.0
        %2149 = vmatprep.mubr.f32.mxu0 0.0
        %v2150 = vand.u32 %v195, 4294901760
        %v2151 = vsub.f32 %v195, %v2150
        %v2152 = vand.u32 %v2151, 4294901760
        %2153 = vmatmul.mubr.f32.gmra.mrb[0].mxu0 %v2152
        %v2154 = vpop.f32.mrb[0].mxu0
        %v2155 = vadd.f32 %v2049, %v2154
        %v2156 = vpop.f32.mrb[0].mxu0
        %v2157 = vadd.f32 %v2051, %v2156
        %2158 = vdwg.mxu0
        %v2159 = vand.u32 %v261, 4294901760
        %v2160 = vsub.f32 %v261, %v2159
        %v2161 = vand.u32 %v2160, 4294901760
        %2162 = vmatprep.subr.mxu0 %v2161
        %v2163 = vand.u32 %v260, 4294901760
        %v2164 = vsub.f32 %v260, %v2163
        %v2165 = vand.u32 %v2164, 4294901760
        %2166 = vmatpush1.msra.mxu0 %v2165
        %v2167 = vand.u32 %v263, 4294901760
        %v2168 = vsub.f32 %v263, %v2167
        %v2169 = vand.u32 %v2168, 4294901760
        %2170 = vmatprep.subr.mxu0 %v2169
        %v2171 = vand.u32 %v262, 4294901760
        %v2172 = vsub.f32 %v262, %v2171
        %v2173 = vand.u32 %v2172, 4294901760
        %2174 = vmatpush1.msra.mxu0 %v2173
        %v2175 = vand.u32 %v265, 4294901760
        %v2176 = vsub.f32 %v265, %v2175
        %v2177 = vand.u32 %v2176, 4294901760
        %2178 = vmatprep.subr.mxu0 %v2177
        %v2179 = vand.u32 %v264, 4294901760
        %v2180 = vsub.f32 %v264, %v2179
        %v2181 = vand.u32 %v2180, 4294901760
        %2182 = vmatpush1.msra.mxu0 %v2181
        %v2183 = vand.u32 %v267, 4294901760
        %v2184 = vsub.f32 %v267, %v2183
        %v2185 = vand.u32 %v2184, 4294901760
        %2186 = vmatprep.subr.mxu0 %v2185
        %v2187 = vand.u32 %v266, 4294901760
        %v2188 = vsub.f32 %v266, %v2187
        %v2189 = vand.u32 %v2188, 4294901760
        %2190 = vmatpush1.msra.mxu0 %v2189
        %v2191 = vand.u32 %v269, 4294901760
        %v2192 = vsub.f32 %v269, %v2191
        %v2193 = vand.u32 %v2192, 4294901760
        %2194 = vmatprep.subr.mxu0 %v2193
        %v2195 = vand.u32 %v268, 4294901760
        %v2196 = vsub.f32 %v268, %v2195
        %v2197 = vand.u32 %v2196, 4294901760
        %2198 = vmatpush1.msra.mxu0 %v2197
        %v2199 = vand.u32 %v271, 4294901760
        %v2200 = vsub.f32 %v271, %v2199
        %v2201 = vand.u32 %v2200, 4294901760
        %2202 = vmatprep.subr.mxu0 %v2201
        %v2203 = vand.u32 %v270, 4294901760
        %v2204 = vsub.f32 %v270, %v2203
        %v2205 = vand.u32 %v2204, 4294901760
        %2206 = vmatpush1.msra.mxu0 %v2205
        %v2207 = vand.u32 %v273, 4294901760
        %v2208 = vsub.f32 %v273, %v2207
        %v2209 = vand.u32 %v2208, 4294901760
        %2210 = vmatprep.subr.mxu0 %v2209
        %v2211 = vand.u32 %v272, 4294901760
        %v2212 = vsub.f32 %v272, %v2211
        %v2213 = vand.u32 %v2212, 4294901760
        %2214 = vmatpush1.msra.mxu0 %v2213
        %v2215 = vand.u32 %v275, 4294901760
        %v2216 = vsub.f32 %v275, %v2215
        %v2217 = vand.u32 %v2216, 4294901760
        %2218 = vmatprep.subr.mxu0 %v2217
        %v2219 = vand.u32 %v274, 4294901760
        %v2220 = vsub.f32 %v274, %v2219
        %v2221 = vand.u32 %v2220, 4294901760
        %2222 = vmatpush1.msra.mxu0 %v2221
        %v2223 = vand.u32 %v277, 4294901760
        %v2224 = vsub.f32 %v277, %v2223
        %v2225 = vand.u32 %v2224, 4294901760
        %2226 = vmatprep.subr.mxu0 %v2225
        %v2227 = vand.u32 %v276, 4294901760
        %v2228 = vsub.f32 %v276, %v2227
        %v2229 = vand.u32 %v2228, 4294901760
        %2230 = vmatpush1.msra.mxu0 %v2229
        %v2231 = vand.u32 %v279, 4294901760
        %v2232 = vsub.f32 %v279, %v2231
        %v2233 = vand.u32 %v2232, 4294901760
        %2234 = vmatprep.subr.mxu0 %v2233
        %v2235 = vand.u32 %v278, 4294901760
        %v2236 = vsub.f32 %v278, %v2235
        %v2237 = vand.u32 %v2236, 4294901760
        %2238 = vmatpush1.msra.mxu0 %v2237
        %v2239 = vand.u32 %v281, 4294901760
        %v2240 = vsub.f32 %v281, %v2239
        %v2241 = vand.u32 %v2240, 4294901760
        %2242 = vmatprep.subr.mxu0 %v2241
        %v2243 = vand.u32 %v280, 4294901760
        %v2244 = vsub.f32 %v280, %v2243
        %v2245 = vand.u32 %v2244, 4294901760
        %2246 = vmatpush1.msra.mxu0 %v2245
        %v2247 = vand.u32 %v283, 4294901760
        %v2248 = vsub.f32 %v283, %v2247
        %v2249 = vand.u32 %v2248, 4294901760
        %2250 = vmatprep.subr.mxu0 %v2249
        %v2251 = vand.u32 %v282, 4294901760
        %v2252 = vsub.f32 %v282, %v2251
        %v2253 = vand.u32 %v2252, 4294901760
        %2254 = vmatpush1.msra.mxu0 %v2253
        %v2255 = vand.u32 %v285, 4294901760
        %v2256 = vsub.f32 %v285, %v2255
        %v2257 = vand.u32 %v2256, 4294901760
        %2258 = vmatprep.subr.mxu0 %v2257
        %v2259 = vand.u32 %v284, 4294901760
        %v2260 = vsub.f32 %v284, %v2259
        %v2261 = vand.u32 %v2260, 4294901760
        %2262 = vmatpush1.msra.mxu0 %v2261
        %v2263 = vand.u32 %v287, 4294901760
        %v2264 = vsub.f32 %v287, %v2263
        %v2265 = vand.u32 %v2264, 4294901760
        %2266 = vmatprep.subr.mxu0 %v2265
        %v2267 = vand.u32 %v286, 4294901760
        %v2268 = vsub.f32 %v286, %v2267
        %v2269 = vand.u32 %v2268, 4294901760
        %2270 = vmatpush1.msra.mxu0 %v2269
        %v2271 = vand.u32 %v289, 4294901760
        %v2272 = vsub.f32 %v289, %v2271
        %v2273 = vand.u32 %v2272, 4294901760
        %2274 = vmatprep.subr.mxu0 %v2273
        %v2275 = vand.u32 %v288, 4294901760
        %v2276 = vsub.f32 %v288, %v2275
        %v2277 = vand.u32 %v2276, 4294901760
        %2278 = vmatpush1.msra.mxu0 %v2277
        %v2279 = vand.u32 %v291, 4294901760
        %v2280 = vsub.f32 %v291, %v2279
        %v2281 = vand.u32 %v2280, 4294901760
        %2282 = vmatprep.subr.mxu0 %v2281
        %v2283 = vand.u32 %v290, 4294901760
        %v2284 = vsub.f32 %v290, %v2283
        %v2285 = vand.u32 %v2284, 4294901760
        %2286 = vmatpush1.msra.mxu0 %v2285
        %2287 = vmatprep.subr.mxu0 0.0
        %2288 = vmatpush1.msra.mxu0 0.0
        %2289 = vmatprep.subr.mxu0 0.0
        %2290 = vmatpush1.msra.mxu0 0.0
        %2291 = vmatprep.subr.mxu0 0.0
        %2292 = vmatpush1.msra.mxu0 0.0
        %2293 = vmatprep.subr.mxu0 0.0
        %2294 = vmatpush1.msra.mxu0 0.0
        %2295 = vmatprep.subr.mxu0 0.0
        %2296 = vmatpush1.msra.mxu0 0.0
        %2297 = vmatprep.subr.mxu0 0.0
        %2298 = vmatpush1.msra.mxu0 0.0
        %2299 = vmatprep.subr.mxu0 0.0
        %2300 = vmatpush1.msra.mxu0 0.0
        %2301 = vmatprep.subr.mxu0 0.0
        %2302 = vmatpush1.msra.mxu0 0.0
        %2303 = vmatprep.subr.mxu0 0.0
        %2304 = vmatpush1.msra.mxu0 0.0
        %2305 = vmatprep.subr.mxu0 0.0
        %2306 = vmatpush1.msra.mxu0 0.0
        %2307 = vmatprep.subr.mxu0 0.0
        %2308 = vmatpush1.msra.mxu0 0.0
        %2309 = vmatprep.subr.mxu0 0.0
        %2310 = vmatpush1.msra.mxu0 0.0
        %2311 = vmatprep.subr.mxu0 0.0
        %2312 = vmatpush1.msra.mxu0 0.0
        %2313 = vmatprep.subr.mxu0 0.0
        %2314 = vmatpush1.msra.mxu0 0.0
        %2315 = vmatprep.subr.mxu0 0.0
        %2316 = vmatpush1.msra.mxu0 0.0
        %2317 = vmatprep.subr.mxu0 0.0
        %2318 = vmatpush1.msra.mxu0 0.0
        %2319 = vmatprep.mubr.f32.mxu0 0.0
        %v2320 = vand.u32 %v195, 4294901760
        %2321 = vmatmul.mubr.f32.gmra.mrb[0].mxu0 %v2320
        %v2322 = vpop.f32.mrb[0].mxu0
        %v2323 = vadd.f32 %v2155, %v2322
        %v2324 = vpop.f32.mrb[0].mxu0
        %v2325 = vadd.f32 %v2157, %v2324
        %2326 = vdwg.mxu0
        %v2327 = vand.u32 %v261, 4294901760
        %2328 = vmatprep.subr.mxu0 %v2327
        %v2329 = vand.u32 %v260, 4294901760
        %2330 = vmatpush1.msra.mxu0 %v2329
        %v2331 = vand.u32 %v263, 4294901760
        %2332 = vmatprep.subr.mxu0 %v2331
        %v2333 = vand.u32 %v262, 4294901760
        %2334 = vmatpush1.msra.mxu0 %v2333
        %v2335 = vand.u32 %v265, 4294901760
        %2336 = vmatprep.subr.mxu0 %v2335
        %v2337 = vand.u32 %v264, 4294901760
        %2338 = vmatpush1.msra.mxu0 %v2337
        %v2339 = vand.u32 %v267, 4294901760
        %2340 = vmatprep.subr.mxu0 %v2339
        %v2341 = vand.u32 %v266, 4294901760
        %2342 = vmatpush1.msra.mxu0 %v2341
        %v2343 = vand.u32 %v269, 4294901760
        %2344 = vmatprep.subr.mxu0 %v2343
        %v2345 = vand.u32 %v268, 4294901760
        %2346 = vmatpush1.msra.mxu0 %v2345
        %v2347 = vand.u32 %v271, 4294901760
        %2348 = vmatprep.subr.mxu0 %v2347
        %v2349 = vand.u32 %v270, 4294901760
        %2350 = vmatpush1.msra.mxu0 %v2349
        %v2351 = vand.u32 %v273, 4294901760
        %2352 = vmatprep.subr.mxu0 %v2351
        %v2353 = vand.u32 %v272, 4294901760
        %2354 = vmatpush1.msra.mxu0 %v2353
        %v2355 = vand.u32 %v275, 4294901760
        %2356 = vmatprep.subr.mxu0 %v2355
        %v2357 = vand.u32 %v274, 4294901760
        %2358 = vmatpush1.msra.mxu0 %v2357
        %v2359 = vand.u32 %v277, 4294901760
        %2360 = vmatprep.subr.mxu0 %v2359
        %v2361 = vand.u32 %v276, 4294901760
        %2362 = vmatpush1.msra.mxu0 %v2361
        %v2363 = vand.u32 %v279, 4294901760
        %2364 = vmatprep.subr.mxu0 %v2363
        %v2365 = vand.u32 %v278, 4294901760
        %2366 = vmatpush1.msra.mxu0 %v2365
        %v2367 = vand.u32 %v281, 4294901760
        %2368 = vmatprep.subr.mxu0 %v2367
        %v2369 = vand.u32 %v280, 4294901760
        %2370 = vmatpush1.msra.mxu0 %v2369
        %v2371 = vand.u32 %v283, 4294901760
        %2372 = vmatprep.subr.mxu0 %v2371
        %v2373 = vand.u32 %v282, 4294901760
        %2374 = vmatpush1.msra.mxu0 %v2373
        %v2375 = vand.u32 %v285, 4294901760
        %2376 = vmatprep.subr.mxu0 %v2375
        %v2377 = vand.u32 %v284, 4294901760
        %2378 = vmatpush1.msra.mxu0 %v2377
        %v2379 = vand.u32 %v287, 4294901760
        %2380 = vmatprep.subr.mxu0 %v2379
        %v2381 = vand.u32 %v286, 4294901760
        %2382 = vmatpush1.msra.mxu0 %v2381
        %v2383 = vand.u32 %v289, 4294901760
        %2384 = vmatprep.subr.mxu0 %v2383
        %v2385 = vand.u32 %v288, 4294901760
        %2386 = vmatpush1.msra.mxu0 %v2385
        %v2387 = vand.u32 %v291, 4294901760
        %2388 = vmatprep.subr.mxu0 %v2387
        %v2389 = vand.u32 %v290, 4294901760
        %2390 = vmatpush1.msra.mxu0 %v2389
        %2391 = vmatprep.subr.mxu0 0.0
        %2392 = vmatpush1.msra.mxu0 0.0
        %2393 = vmatprep.subr.mxu0 0.0
        %2394 = vmatpush1.msra.mxu0 0.0
        %2395 = vmatprep.subr.mxu0 0.0
        %2396 = vmatpush1.msra.mxu0 0.0
        %2397 = vmatprep.subr.mxu0 0.0
        %2398 = vmatpush1.msra.mxu0 0.0
        %2399 = vmatprep.subr.mxu0 0.0
        %2400 = vmatpush1.msra.mxu0 0.0
        %2401 = vmatprep.subr.mxu0 0.0
        %2402 = vmatpush1.msra.mxu0 0.0
        %2403 = vmatprep.subr.mxu0 0.0
        %2404 = vmatpush1.msra.mxu0 0.0
        %2405 = vmatprep.subr.mxu0 0.0
        %2406 = vmatpush1.msra.mxu0 0.0
        %2407 = vmatprep.subr.mxu0 0.0
        %2408 = vmatpush1.msra.mxu0 0.0
        %2409 = vmatprep.subr.mxu0 0.0
        %2410 = vmatpush1.msra.mxu0 0.0
        %2411 = vmatprep.subr.mxu0 0.0
        %2412 = vmatpush1.msra.mxu0 0.0
        %2413 = vmatprep.subr.mxu0 0.0
        %2414 = vmatpush1.msra.mxu0 0.0
        %2415 = vmatprep.subr.mxu0 0.0
        %2416 = vmatpush1.msra.mxu0 0.0
        %2417 = vmatprep.subr.mxu0 0.0
        %2418 = vmatpush1.msra.mxu0 0.0
        %2419 = vmatprep.subr.mxu0 0.0
        %2420 = vmatpush1.msra.mxu0 0.0
        %2421 = vmatprep.subr.mxu0 0.0
        %2422 = vmatpush1.msra.mxu0 0.0
        %2423 = vmatprep.mubr.f32.mxu0 0.0
        %v2424 = vand.u32 %v195, 4294901760
        %2425 = vmatmul.mubr.f32.gmra.mrb[0].mxu0 %v2424
        %v2426 = vpop.f32.mrb[0].mxu0
        %v2427 = vadd.f32 %v2323, %v2426
        %v2428 = vpop.f32.mrb[0].mxu0
        %v2429 = vadd.f32 %v2325, %v2428
        %2430 = vdwg.mxu0
        %2431 = vst [vmem:[%s192] sm:$0xff] %v2427
        %s2432 = scalar_lea.vmem %s192, 8 [#allocation7]
        %2433 = vst [vmem:[%s2432] sm:$0xff] %v2429
        %s2434 = sand.u32 %s91, 1
        %s2435 = scalar_lea.sflag [#allocation4], %s2434
        %s2436 = sand.u32 %s91, 1
        %s2437 = smul.addr %s2436, 16
        %s2438 = scalar_lea.vmem [#allocation7], %s2437
        // Predicated region
        $region37: #{tpu_custom_call.1} parent=27 // pred_check
          %p2439 = pneg %p101
        $region38: #{tpu_custom_call.1} parent=27 // pred_check_branch
          %2441 = sbr.rel (%p2439) target = $region40
        $region39: #{tpu_custom_call.1} parent=27 // pred_region
          %s2443 = ssub.s32 256, 256
          %2444 = vsyncadd %s2435, %s2443
          %s2445 = smul.addr %s24, 2
          %s2446 = sadd.s32 %s25, %s2445
          %s2447 = smul.addr %s2446, 128
          %s2448 = scalar_lea.hbm %s2, %s2447
          %s2449 = sshll.u32 %s2438, 4
          %s2450 = int_to_ptr.vmem [resolvable:$true] %s2449
          %2455 = dma.vmem_to_hbm [thread:$0]  %s2450, 256, %s2448, %s2435, 128, 128, 8
        $region40: #{tpu_custom_call.1} parent=27 // pred_fallthru
          _
      $region28: #{tpu_custom_call.1} parent=5 // pred_fallthru
        _
      %p2456 = scmp.le.s32.totalorder 2, %s15
      // Predicated region
      $region41: #{tpu_custom_call.1} parent=5 // pred_check
        %p2457 = pneg %p2456
      $region42: #{tpu_custom_call.1} parent=5 // pred_check_branch
        %2459 = sbr.rel (%p2457) target = $region44
      $region43: #{tpu_custom_call.1} parent=5 // pred_region
        %s2460 = ssub.s32 %s15, 2
        // Predicated region
        $region45: #{tpu_custom_call.1} parent=43 // pred_check
          %p2461 = pneg %p107
        $region46: #{tpu_custom_call.1} parent=43 // pred_check_branch
          %2463 = sbr.rel (%p2461) target = $region48
        $region47: #{tpu_custom_call.1} parent=43 // pred_region
          %s2464 = sand.u32 %s92, 1
          %s2465 = scalar_lea.sflag [#allocation4], %s2464
          %s2466 = sand.u32 %s92, 1
          %s2467 = smul.addr %s2466, 16
          %s2468 = scalar_lea.vmem [#allocation7], %s2467
          %2469 = dma.done %s2465, 256
        $region48: #{tpu_custom_call.1} parent=43 // pred_fallthru
          _
      $region44: #{tpu_custom_call.1} parent=5 // pred_fallthru
        _
    $region6: #{tpu_custom_call.1} parent=1 // loop_footer
      %s19 = sadd.s32 1, %s15
    $region7: #{tpu_custom_call.1} parent=1 // loop_footer_branch
      %14 = sbr.rel target = $region3
    $region8: #{tpu_custom_call.1} parent=1 // loop_exit
      _
    %2470 = vsyncpa [#allocation3], 1
    %s2471 = scalar_lea.sflag [#allocation3], 1
    %2472 = vsyncpa %s2471, 1
    %2473 = vsyncpa [#allocation6], 1
    %s2474 = scalar_lea.sflag [#allocation6], 1
    %2475 = vsyncpa %s2474, 1
    %2476 = vsyncpa [#allocation4], 1
    %s2477 = scalar_lea.sflag [#allocation4], 1
    %2478 = vsyncpa %s2477, 1

</llo_original>
